<compile_context>
chip_gen: v7x
topology: tpu7x:2x2x1
jax: 0.10.0
libtpu: 0.0.40
codegen_flags: <defaults>
</compile_context>

<pallas_src>
import functools

import jax
import jax.numpy as jnp
import numpy as np
from jax.experimental import pallas as pl
from jax.experimental.pallas import tpu as pltpu


def _log_sigmoid(x):
    # numerically stable log(sigmoid(x)) = min(x, 0) - log(1 + exp(-|x|))
    return jnp.minimum(x, 0.0) - jnp.log1p(jnp.exp(-jnp.abs(x)))


def _neg_sampling_kernel(x_ref, neg_ref, ctx_ref, wt_ref, out_ref, *, n_valid):
    # x_ref:   (T, 1) int32  target token per position
    # neg_ref: (T, K) int32  negative samples per position
    # ctx_ref: (T, E) f32    context vectors
    # wt_ref:  (E, V) f32    transposed embedding table (transposed in wrapper)
    # out_ref: (1, 1) f32    loss accumulator (same block revisited every step)
    pid = pl.program_id(0)

    @pl.when(pid == 0)
    def _init():
        out_ref[...] = jnp.zeros_like(out_ref)

    ctx = ctx_ref[...]                                   # (T, E)
    wt = wt_ref[...]                                     # (E, V)
    T = ctx.shape[0]
    V = wt.shape[1]
    K = neg_ref.shape[1]

    # One MXU matmul gives scores against the whole vocab for this row tile.
    logits = jnp.dot(ctx, wt, preferred_element_type=jnp.float32)   # (T, V)

    # Single hoisted lane-iota, reused for the positive and all K negatives.
    iota_v = jax.lax.broadcasted_iota(jnp.int32, (T, V), 1)

    x = x_ref[...]                                       # (T, 1)
    pos_score = jnp.sum(jnp.where(iota_v == x, logits, 0.0),
                        axis=1, keepdims=True)           # (T, 1)
    loss_rows = _log_sigmoid(pos_score)                  # (T, 1)

    neg = neg_ref[...]                                   # (T, K)
    for k in range(K):                                   # K small & static: unrolled
        nk = neg[:, k:k + 1]                             # (T, 1)
        neg_score = jnp.sum(jnp.where(iota_v == nk, logits, 0.0),
                            axis=1, keepdims=True)       # (T, 1)
        loss_rows = loss_rows + _log_sigmoid(-neg_score)

    # Mask rows that are padding of the flattened B*S axis.
    rows = pid * T + jax.lax.broadcasted_iota(jnp.int32, (T, 1), 0)
    valid = (rows < n_valid).astype(jnp.float32)

    tile_loss = -jnp.sum(loss_rows * valid)
    out_ref[...] += tile_loss.reshape(1, 1)


def negative_sampling_loss(X, neg_samples, context, W, *, tile=128):
    B, S = X.shape
    K = neg_samples.shape[-1]
    E = context.shape[-1]
    V = W.shape[0]
    N = B * S
    G = pl.cdiv(N, tile)
    n_pad = G * tile

    x2d = X.reshape(N, 1).astype(jnp.int32)
    neg2d = neg_samples.reshape(N, K).astype(jnp.int32)
    ctx2d = context.reshape(N, E).astype(jnp.float32)
    if n_pad != N:
        pad = ((0, n_pad - N), (0, 0))
        x2d = jnp.pad(x2d, pad)
        neg2d = jnp.pad(neg2d, pad)
        ctx2d = jnp.pad(ctx2d, pad)

    # Transpose once in the wrapper so the kernel matmul is (T,E) x (E,V).
    wt = W.astype(jnp.float32).T                         # (E, V)

    kernel = functools.partial(_neg_sampling_kernel, n_valid=N)

    cost = pl.CostEstimate(
        flops=2 * n_pad * E * V + 4 * n_pad * V * (1 + K),
        transcendentals=2 * n_pad * (1 + K),
        bytes_accessed=4 * (n_pad * (1 + K + E) + E * V + 1),
    )

    out = pl.pallas_call(
        kernel,
        out_shape=jax.ShapeDtypeStruct((1, 1), jnp.float32),
        grid_spec=pltpu.PrefetchScalarGridSpec(
            num_scalar_prefetch=0,
            grid=(G,),
            in_specs=[
                pl.BlockSpec((tile, 1), lambda i: (i, 0)),
                pl.BlockSpec((tile, K), lambda i: (i, 0)),
                pl.BlockSpec((tile, E), lambda i: (i, 0)),
                pl.BlockSpec((E, V), lambda i: (0, 0)),   # table resident across grid
            ],
            out_specs=pl.BlockSpec((1, 1), lambda i: (0, 0)),
        ),
        compiler_params=pltpu.CompilerParams(
            dimension_semantics=("arbitrary",),           # revisited accumulator output
            vmem_limit_bytes=32 * 1024 * 1024,            # safe for v7x 64 MiB VMEM
        ),
        cost_estimate=cost,
    )(x2d, neg2d, ctx2d, wt)
    return out[0, 0]


def _reference_loss(X, neg_samples, context, W):
    emb = W[X]                                            # (B,S,E)
    pos_loss = jax.nn.log_sigmoid(jnp.sum(emb * context, axis=2))
    neg_emb = W[neg_samples]                              # (B,S,K,E)
    neg_loss = jnp.sum(
        jax.nn.log_sigmoid(jnp.sum(-neg_emb * context[:, :, None, :], axis=3)), axis=2
    )
    return -jnp.sum(pos_loss + neg_loss)


def _run_case(key, B, S, E, V, K, power=0.75, pad_idx=0):
    k_w, k_ctx, k_x, k_neg = jax.random.split(key, 4)
    W = jax.random.uniform(k_w, (V, E), jnp.float32, minval=-0.05, maxval=0.05)
    W = W.at[pad_idx].set(0.0)                            # nn.Embedding padding_idx row
    counter = jnp.arange(1, V + 1, dtype=jnp.float32)
    logits = power * jnp.log(counter)                     # unigram**power sampler
    neg_samples = jax.random.categorical(k_neg, logits, shape=(B, S, K)).astype(jnp.int32)
    X = jax.random.randint(k_x, (B, S), 0, V, dtype=jnp.int32)
    context = jax.random.normal(k_ctx, (B, S, E), jnp.float32)

    loss = negative_sampling_loss(X, neg_samples, context, W)
    jax.block_until_ready(loss)
    ref = _reference_loss(X, neg_samples, context, W)
    np.testing.assert_allclose(np.asarray(loss), np.asarray(ref), rtol=1e-5, atol=1e-5)


if __name__ == "__main__":
    key = jax.random.PRNGKey(0)
    k1, k2 = jax.random.split(key)
    # Small shapes implied by the forward: batch=2, seq=8, embed=32, vocab=32, K=4.
    _run_case(k1, B=2, S=8, E=32, V=32, K=4)
    # Second case exercising multiple grid tiles + row padding/masking.
    _run_case(k2, B=3, S=50, E=32, V=64, K=5)
    print("KERNEL_OK")
</pallas_src>

<mosaic_0001>
module attributes {stable_mosaic.version = 11 : i64} {
  func.func @_neg_sampling_kernel(%arg0: i32, %arg1: memref<128x1xi32, #tpu.memory_space<vmem>>, %arg2: memref<128x4xi32, #tpu.memory_space<vmem>>, %arg3: memref<128x32xf32, #tpu.memory_space<vmem>>, %arg4: memref<32x32xf32, #tpu.memory_space<vmem>>, %arg5: memref<1x1xf32, #tpu.memory_space<vmem>>) attributes {dimension_semantics = [#tpu.dimension_semantics<arbitrary>], iteration_bounds = array<i64: 1>, scalar_prefetch = 0 : i64, scratch_operands = 0 : i64, tpu.core_type = #tpu.core_type<tc>, window_params = [{transform_indices = @transform_0, window_bounds = array<i64: 128, 1>}, {transform_indices = @transform_1, window_bounds = array<i64: 128, 4>}, {transform_indices = @transform_2, window_bounds = array<i64: 128, 32>}, {pipeline_mode = #tpu.pipeline_mode<synchronous>, transform_indices = @transform_3, window_bounds = array<i64: 32, 32>}, {pipeline_mode = #tpu.pipeline_mode<synchronous>, transform_indices = @transform_4, window_bounds = array<i64: 1, 1>}]} {
    %c0_i32 = arith.constant 0 : i32
    %0 = arith.cmpi eq, %arg0, %c0_i32 : i32
    %1 = arith.extui %0 : i1 to i32
    %c0_i32_0 = arith.constant 0 : i32
    %2 = arith.cmpi ne, %1, %c0_i32_0 : i32
    scf.if %2 {
      %cst_38 = arith.constant 0.000000e+00 : f32
      %113 = vector.broadcast %cst_38 : f32 to vector<1x1xf32>
      %c0_39 = arith.constant 0 : index
      %c0_40 = arith.constant 0 : index
      %114 = vector.load %arg5[%c0_39, %c0_40] : memref<1x1xf32, #tpu.memory_space<vmem>>, vector<1x1xf32>
      tpu.vector_store %arg5[%c0_39, %c0_40], %113 {strides = array<i32>} : memref<1x1xf32, #tpu.memory_space<vmem>>, vector<1x1xf32>,
    } else {
    }
    %c0 = arith.constant 0 : index
    %c0_1 = arith.constant 0 : index
    %3 = vector.load %arg3[%c0, %c0_1] : memref<128x32xf32, #tpu.memory_space<vmem>>, vector<128x32xf32>
    %c0_2 = arith.constant 0 : index
    %c0_3 = arith.constant 0 : index
    %4 = vector.load %arg4[%c0_2, %c0_3] : memref<32x32xf32, #tpu.memory_space<vmem>>, vector<32x32xf32>
    %cst = arith.constant dense<0.000000e+00> : vector<128x32xf32>
    %5 = tpu.matmul %3, %4, %cst {dimension_numbers = #tpu.dot_dimension_numbers<[1], [0], [0], [1], [0, 0, 1, 1], [], []>} : vector<128x32xf32>, vector<32x32xf32>, vector<128x32xf32> -> vector<128x32xf32>
    %6 = tpu.iota {dimensions = array<i32: 1>} : vector<128x32xi32>
    %c0_4 = arith.constant 0 : index
    %c0_5 = arith.constant 0 : index
    %7 = vector.load %arg1[%c0_4, %c0_5] : memref<128x1xi32, #tpu.memory_space<vmem>>, vector<128x1xi32>
    %8 = vector.broadcast %7 : vector<128x1xi32> to vector<128x32xi32>
    %9 = arith.cmpi eq, %6, %8 : vector<128x32xi32>
    %cst_6 = arith.constant 0.000000e+00 : f32
    %10 = vector.broadcast %cst_6 : f32 to vector<128x32xf32>
    %11 = arith.select %9, %5, %10 : vector<128x32xi1>, vector<128x32xf32>
    %cst_7 = arith.constant dense<0.000000e+00> : vector<128xf32>
    %12 = vector.multi_reduction <add>, %11, %cst_7 [1] : vector<128x32xf32> to vector<128xf32>
    %13 = vector.shape_cast %12 : vector<128xf32> to vector<128x1xf32>
    %cst_8 = arith.constant 0.000000e+00 : f32
    %14 = vector.broadcast %cst_8 : f32 to vector<128x1xf32>
    %15 = arith.minimumf %13, %14 : vector<128x1xf32>
    %16 = math.absf %13 : vector<128x1xf32>
    %cst_9 = arith.constant 0.000000e+00 : f32
    %17 = vector.broadcast %cst_9 : f32 to vector<128x1xf32>
    %18 = arith.subf %17, %16 : vector<128x1xf32>
    %19 = math.exp %18 : vector<128x1xf32>
    %20 = math.log1p %19 : vector<128x1xf32>
    %21 = arith.subf %15, %20 : vector<128x1xf32>
    %c0_10 = arith.constant 0 : index
    %c0_11 = arith.constant 0 : index
    %22 = vector.load %arg2[%c0_10, %c0_11] : memref<128x4xi32, #tpu.memory_space<vmem>>, vector<128x4xi32>
    %23 = vector.extract_strided_slice %22 {offsets = [0, 0], sizes = [128, 1], strides = [1, 1]} : vector<128x4xi32> to vector<128x1xi32>
    %24 = vector.broadcast %23 : vector<128x1xi32> to vector<128x32xi32>
    %25 = arith.cmpi eq, %6, %24 : vector<128x32xi32>
    %cst_12 = arith.constant 0.000000e+00 : f32
    %26 = vector.broadcast %cst_12 : f32 to vector<128x32xf32>
    %27 = arith.select %25, %5, %26 : vector<128x32xi1>, vector<128x32xf32>
    %cst_13 = arith.constant dense<0.000000e+00> : vector<128xf32>
    %28 = vector.multi_reduction <add>, %27, %cst_13 [1] : vector<128x32xf32> to vector<128xf32>
    %29 = vector.shape_cast %28 : vector<128xf32> to vector<128x1xf32>
    %cst_14 = arith.constant 0.000000e+00 : f32
    %30 = vector.broadcast %cst_14 : f32 to vector<128x1xf32>
    %31 = arith.subf %30, %29 : vector<128x1xf32>
    %cst_15 = arith.constant 0.000000e+00 : f32
    %32 = vector.broadcast %cst_15 : f32 to vector<128x1xf32>
    %33 = arith.minimumf %31, %32 : vector<128x1xf32>
    %34 = math.absf %31 : vector<128x1xf32>
    %cst_16 = arith.constant 0.000000e+00 : f32
    %35 = vector.broadcast %cst_16 : f32 to vector<128x1xf32>
    %36 = arith.subf %35, %34 : vector<128x1xf32>
    %37 = math.exp %36 : vector<128x1xf32>
    %38 = math.log1p %37 : vector<128x1xf32>
    %39 = arith.subf %33, %38 : vector<128x1xf32>
    %40 = arith.addf %21, %39 : vector<128x1xf32>
    %41 = vector.extract_strided_slice %22 {offsets = [0, 1], sizes = [128, 1], strides = [1, 1]} : vector<128x4xi32> to vector<128x1xi32>
    %42 = vector.broadcast %41 : vector<128x1xi32> to vector<128x32xi32>
    %43 = arith.cmpi eq, %6, %42 : vector<128x32xi32>
    %cst_17 = arith.constant 0.000000e+00 : f32
    %44 = vector.broadcast %cst_17 : f32 to vector<128x32xf32>
    %45 = arith.select %43, %5, %44 : vector<128x32xi1>, vector<128x32xf32>
    %cst_18 = arith.constant dense<0.000000e+00> : vector<128xf32>
    %46 = vector.multi_reduction <add>, %45, %cst_18 [1] : vector<128x32xf32> to vector<128xf32>
    %47 = vector.shape_cast %46 : vector<128xf32> to vector<128x1xf32>
    %cst_19 = arith.constant 0.000000e+00 : f32
    %48 = vector.broadcast %cst_19 : f32 to vector<128x1xf32>
    %49 = arith.subf %48, %47 : vector<128x1xf32>
    %cst_20 = arith.constant 0.000000e+00 : f32
    %50 = vector.broadcast %cst_20 : f32 to vector<128x1xf32>
    %51 = arith.minimumf %49, %50 : vector<128x1xf32>
    %52 = math.absf %49 : vector<128x1xf32>
    %cst_21 = arith.constant 0.000000e+00 : f32
    %53 = vector.broadcast %cst_21 : f32 to vector<128x1xf32>
    %54 = arith.subf %53, %52 : vector<128x1xf32>
    %55 = math.exp %54 : vector<128x1xf32>
    %56 = math.log1p %55 : vector<128x1xf32>
    %57 = arith.subf %51, %56 : vector<128x1xf32>
    %58 = arith.addf %40, %57 : vector<128x1xf32>
    %59 = vector.extract_strided_slice %22 {offsets = [0, 2], sizes = [128, 1], strides = [1, 1]} : vector<128x4xi32> to vector<128x1xi32>
    %60 = vector.broadcast %59 : vector<128x1xi32> to vector<128x32xi32>
    %61 = arith.cmpi eq, %6, %60 : vector<128x32xi32>
    %cst_22 = arith.constant 0.000000e+00 : f32
    %62 = vector.broadcast %cst_22 : f32 to vector<128x32xf32>
    %63 = arith.select %61, %5, %62 : vector<128x32xi1>, vector<128x32xf32>
    %cst_23 = arith.constant dense<0.000000e+00> : vector<128xf32>
    %64 = vector.multi_reduction <add>, %63, %cst_23 [1] : vector<128x32xf32> to vector<128xf32>
    %65 = vector.shape_cast %64 : vector<128xf32> to vector<128x1xf32>
    %cst_24 = arith.constant 0.000000e+00 : f32
    %66 = vector.broadcast %cst_24 : f32 to vector<128x1xf32>
    %67 = arith.subf %66, %65 : vector<128x1xf32>
    %cst_25 = arith.constant 0.000000e+00 : f32
    %68 = vector.broadcast %cst_25 : f32 to vector<128x1xf32>
    %69 = arith.minimumf %67, %68 : vector<128x1xf32>
    %70 = math.absf %67 : vector<128x1xf32>
    %cst_26 = arith.constant 0.000000e+00 : f32
    %71 = vector.broadcast %cst_26 : f32 to vector<128x1xf32>
    %72 = arith.subf %71, %70 : vector<128x1xf32>
    %73 = math.exp %72 : vector<128x1xf32>
    %74 = math.log1p %73 : vector<128x1xf32>
    %75 = arith.subf %69, %74 : vector<128x1xf32>
    %76 = arith.addf %58, %75 : vector<128x1xf32>
    %77 = vector.extract_strided_slice %22 {offsets = [0, 3], sizes = [128, 1], strides = [1, 1]} : vector<128x4xi32> to vector<128x1xi32>
    %78 = vector.broadcast %77 : vector<128x1xi32> to vector<128x32xi32>
    %79 = arith.cmpi eq, %6, %78 : vector<128x32xi32>
    %cst_27 = arith.constant 0.000000e+00 : f32
    %80 = vector.broadcast %cst_27 : f32 to vector<128x32xf32>
    %81 = arith.select %79, %5, %80 : vector<128x32xi1>, vector<128x32xf32>
    %cst_28 = arith.constant dense<0.000000e+00> : vector<128xf32>
    %82 = vector.multi_reduction <add>, %81, %cst_28 [1] : vector<128x32xf32> to vector<128xf32>
    %83 = vector.shape_cast %82 : vector<128xf32> to vector<128x1xf32>
    %cst_29 = arith.constant 0.000000e+00 : f32
    %84 = vector.broadcast %cst_29 : f32 to vector<128x1xf32>
    %85 = arith.subf %84, %83 : vector<128x1xf32>
    %cst_30 = arith.constant 0.000000e+00 : f32
    %86 = vector.broadcast %cst_30 : f32 to vector<128x1xf32>
    %87 = arith.minimumf %85, %86 : vector<128x1xf32>
    %88 = math.absf %85 : vector<128x1xf32>
    %cst_31 = arith.constant 0.000000e+00 : f32
    %89 = vector.broadcast %cst_31 : f32 to vector<128x1xf32>
    %90 = arith.subf %89, %88 : vector<128x1xf32>
    %91 = math.exp %90 : vector<128x1xf32>
    %92 = math.log1p %91 : vector<128x1xf32>
    %93 = arith.subf %87, %92 : vector<128x1xf32>
    %94 = arith.addf %76, %93 : vector<128x1xf32>
    %c128_i32 = arith.constant 128 : i32
    %95 = arith.muli %arg0, %c128_i32 : i32
    %96 = tpu.iota {dimensions = array<i32: 0>} : vector<128x1xi32>
    %97 = vector.broadcast %95 : i32 to vector<128x1xi32>
    %98 = arith.addi %97, %96 : vector<128x1xi32>
    %c16_i32 = arith.constant 16 : i32
    %99 = vector.broadcast %c16_i32 : i32 to vector<128x1xi32>
    %100 = arith.cmpi slt, %98, %99 : vector<128x1xi32>
    %101 = arith.extui %100 : vector<128x1xi1> to vector<128x1xi32>
    %102 = arith.sitofp %101 : vector<128x1xi32> to vector<128x1xf32>
    %103 = arith.mulf %94, %102 : vector<128x1xf32>
    %104 = vector.shape_cast %103 : vector<128x1xf32> to vector<1x128x1xf32>
    %cst_32 = arith.constant dense<0.000000e+00> : vector<1xf32>
    %105 = vector.multi_reduction <add>, %104, %cst_32 [1, 2] : vector<1x128x1xf32> to vector<1xf32>
    %106 = vector.shape_cast %105 : vector<1xf32> to vector<1x1x1xf32>
    %107 = vector.extract %106[0, 0, 0] : f32 from vector<1x1x1xf32>
    %cst_33 = arith.constant 0.000000e+00 : f32
    %108 = arith.subf %cst_33, %107 : f32
    %c0_34 = arith.constant 0 : index
    %c0_35 = arith.constant 0 : index
    %109 = vector.load %arg5[%c0_34, %c0_35] : memref<1x1xf32, #tpu.memory_space<vmem>>, vector<1x1xf32>
    %110 = vector.broadcast %108 : f32 to vector<1x1xf32>
    %111 = arith.addf %109, %110 : vector<1x1xf32>
    %c0_36 = arith.constant 0 : index
    %c0_37 = arith.constant 0 : index
    %112 = vector.load %arg5[%c0_36, %c0_37] : memref<1x1xf32, #tpu.memory_space<vmem>>, vector<1x1xf32>
    tpu.vector_store %arg5[%c0_36, %c0_37], %111 {strides = array<i32>} : memref<1x1xf32, #tpu.memory_space<vmem>>, vector<1x1xf32>,
    return
  }
  func.func @transform_0(%arg0: i32) -> (i32, i32) {
    %c0_i32 = arith.constant 0 : i32
    %c0_i32_0 = arith.constant 0 : i32
    return %arg0, %c0_i32 : i32, i32
  }
  func.func @transform_1(%arg0: i32) -> (i32, i32) {
    %c0_i32 = arith.constant 0 : i32
    %c0_i32_0 = arith.constant 0 : i32
    return %arg0, %c0_i32 : i32, i32
  }
  func.func @transform_2(%arg0: i32) -> (i32, i32) {
    %c0_i32 = arith.constant 0 : i32
    %c0_i32_0 = arith.constant 0 : i32
    return %arg0, %c0_i32 : i32, i32
  }
  func.func @transform_3(%arg0: i32) -> (i32, i32) {
    %c0_i32 = arith.constant 0 : i32
    %c0_i32_0 = arith.constant 0 : i32
    %c0_i32_1 = arith.constant 0 : i32
    return %c0_i32, %c0_i32_0 : i32, i32
  }
  func.func @transform_4(%arg0: i32) -> (i32, i32) {
    %c0_i32 = arith.constant 0 : i32
    %c0_i32_0 = arith.constant 0 : i32
    %c0_i32_1 = arith.constant 0 : i32
    return %c0_i32, %c0_i32_0 : i32, i32
  }
}

</mosaic_0001>

<llo_original>
// kernel: tpu_custom_call.1
$region0: #{tpu_custom_call.1}
  #allocation0 [shape = 'u32[]', space=smem, size = 0x4, offset = 0x4, fixed_abs, tag = 'smem constant byte address 0x4 - core index']
  #allocation1 [shape = 'u32[144,128]{1,0:T(1,128)}', space=vmem, size = 0x12000, scoped, tag = 'internal scratch']
  %s0 = inlined_call_operand.vmem [shape: s32[128,1], index: 0, kind: input, shape index: {}]
  %s1 = inlined_call_operand.vmem [shape: s32[128,4], index: 1, kind: input, shape index: {}]
  %s2 = inlined_call_operand.vmem [shape: f32[128,32], index: 2, kind: input, shape index: {}]
  %s3 = inlined_call_operand.vmem [shape: f32[32,32], index: 3, kind: input, shape index: {}]
  %s4 = inlined_call_operand.hbm [shape: f32[1,1], index: 4, kind: output, shape index: {}]
  %s5 = sld [smem:[#allocation0]]
  $region30: #{tpu_custom_call.1} parent=0
    _
  %s7 = ssub.s32 1, %s5
  %s8 = scalar_select 0, %s7, %s5
  $region1: #{tpu_custom_call.1} parent=0
    #allocation2 [shape = 'u8[512]{0}', space=vmem, size = 0x400, scoped, tag = 'output window, operand 0, single buffered']
    #allocation3 [shape = 's32[1]{0}', space=sflag, size = 0x4, scoped, tag = 'scoped memory for tpu_custom_call.1']
    %9 = vsyncpa [#allocation3], 0
    // Predicated region
    $region2: #{tpu_custom_call.1} parent=1 // pred_check
      _
    $region3: #{tpu_custom_call.1} parent=1 // pred_check_branch
      %11 = sbr.rel (0) target = $region5
    $region4: #{tpu_custom_call.1} parent=1 // pred_region
      _
    $region5: #{tpu_custom_call.1} parent=1 // pred_fallthru
      _
    // Predicated region
    $region6: #{tpu_custom_call.1} parent=1 // pred_check
      _
    $region7: #{tpu_custom_call.1} parent=1 // pred_check_branch
      %13 = sbr.rel (0) target = $region9
    $region8: #{tpu_custom_call.1} parent=1 // pred_region
      _
    $region9: #{tpu_custom_call.1} parent=1 // pred_fallthru
      _
    // Predicated region
    $region10: #{tpu_custom_call.1} parent=1 // pred_check
      _
    $region11: #{tpu_custom_call.1} parent=1 // pred_check_branch
      %15 = sbr.rel (0) target = $region13
    $region12: #{tpu_custom_call.1} parent=1 // pred_region
      _
    $region13: #{tpu_custom_call.1} parent=1 // pred_fallthru
      _
    // Predicated region
    $region14: #{tpu_custom_call.1} parent=1 // pred_check
      _
    $region15: #{tpu_custom_call.1} parent=1 // pred_check_branch
      %17 = sbr.rel (0) target = $region17
    $region16: #{tpu_custom_call.1} parent=1 // pred_region
      _
    $region17: #{tpu_custom_call.1} parent=1 // pred_fallthru
      _
    %p18 = scmp.eq.s32.totalorder 0, 0
    // Predicated region
    $region18: #{tpu_custom_call.1} parent=1 // pred_check
      %p19 = pneg %p18
    $region19: #{tpu_custom_call.1} parent=1 // pred_check_branch
      %21 = sbr.rel (%p19) target = $region21
    $region20: #{tpu_custom_call.1} parent=1 // pred_region
      %vm22 = vcmask 0
      %23 = vst.msk [vmem:[#allocation2] sm:$0x1] %vm22, 0.0
    $region21: #{tpu_custom_call.1} parent=1 // pred_fallthru
      _
    %v24 = vld [vmem:[%s2] sm:$0xff]
    %v25 = vld [vmem:[%s2 + $0x8] sm:$0xff]
    %v26 = vld [vmem:[%s2 + $0x10] sm:$0xff]
    %v27 = vld [vmem:[%s2 + $0x18] sm:$0xff]
    %v28 = vld [vmem:[%s2 + $0x20] sm:$0xff]
    %v29 = vld [vmem:[%s2 + $0x28] sm:$0xff]
    %v30 = vld [vmem:[%s2 + $0x30] sm:$0xff]
    %v31 = vld [vmem:[%s2 + $0x38] sm:$0xff]
    %v32 = vld [vmem:[%s2 + $0x40] sm:$0xff]
    %v33 = vld [vmem:[%s2 + $0x48] sm:$0xff]
    %v34 = vld [vmem:[%s2 + $0x50] sm:$0xff]
    %v35 = vld [vmem:[%s2 + $0x58] sm:$0xff]
    %v36 = vld [vmem:[%s2 + $0x60] sm:$0xff]
    %v37 = vld [vmem:[%s2 + $0x68] sm:$0xff]
    %v38 = vld [vmem:[%s2 + $0x70] sm:$0xff]
    %v39 = vld [vmem:[%s2 + $0x78] sm:$0xff]
    %v40 = vld [vmem:[%s3] sm:$0xff]
    %v41 = vld [vmem:[%s3 + $0x8] sm:$0xff]
    %v42 = vld [vmem:[%s3 + $0x10] sm:$0xff]
    %v43 = vld [vmem:[%s3 + $0x18] sm:$0xff]
    %vm44 = vcmask 261120
    %v46 = vsel %vm44, %v24, 0
    %v49 = vsel %vm44, %v25, 0
    %v52 = vsel %vm44, %v26, 0
    %v55 = vsel %vm44, %v27, 0
    %v58 = vsel %vm44, %v28, 0
    %v61 = vsel %vm44, %v29, 0
    %v64 = vsel %vm44, %v30, 0
    %v67 = vsel %vm44, %v31, 0
    %v70 = vsel %vm44, %v32, 0
    %v73 = vsel %vm44, %v33, 0
    %v76 = vsel %vm44, %v34, 0
    %v79 = vsel %vm44, %v35, 0
    %v82 = vsel %vm44, %v36, 0
    %v85 = vsel %vm44, %v37, 0
    %v88 = vsel %vm44, %v38, 0
    %v91 = vsel %vm44, %v39, 0
    %93 = vmatprep.subr.mxu0 0.0
    %94 = vmatpush1.msra.mxu0 %v40
    %95 = vmatprep.subr.mxu0 0.0
    %96 = vmatpush1.msra.mxu0 %v41
    %97 = vmatprep.subr.mxu0 0.0
    %98 = vmatpush1.msra.mxu0 %v42
    %99 = vmatprep.subr.mxu0 0.0
    %100 = vmatpush1.msra.mxu0 %v43
    %101 = vmatprep.subr.mxu0 0.0
    %102 = vmatpush1.msra.mxu0 0.0
    %103 = vmatprep.subr.mxu0 0.0
    %104 = vmatpush1.msra.mxu0 0.0
    %105 = vmatprep.subr.mxu0 0.0
    %106 = vmatpush1.msra.mxu0 0.0
    %107 = vmatprep.subr.mxu0 0.0
    %108 = vmatpush1.msra.mxu0 0.0
    %109 = vmatprep.subr.mxu0 0.0
    %110 = vmatpush1.msra.mxu0 0.0
    %111 = vmatprep.subr.mxu0 0.0
    %112 = vmatpush1.msra.mxu0 0.0
    %113 = vmatprep.subr.mxu0 0.0
    %114 = vmatpush1.msra.mxu0 0.0
    %115 = vmatprep.subr.mxu0 0.0
    %116 = vmatpush1.msra.mxu0 0.0
    %117 = vmatprep.subr.mxu0 0.0
    %118 = vmatpush1.msra.mxu0 0.0
    %119 = vmatprep.subr.mxu0 0.0
    %120 = vmatpush1.msra.mxu0 0.0
    %121 = vmatprep.subr.mxu0 0.0
    %122 = vmatpush1.msra.mxu0 0.0
    %123 = vmatprep.subr.mxu0 0.0
    %124 = vmatpush1.msra.mxu0 0.0
    %125 = vmatprep.subr.mxu0 0.0
    %126 = vmatpush1.msra.mxu0 0.0
    %127 = vmatprep.subr.mxu0 0.0
    %128 = vmatpush1.msra.mxu0 0.0
    %129 = vmatprep.subr.mxu0 0.0
    %130 = vmatpush1.msra.mxu0 0.0
    %131 = vmatprep.subr.mxu0 0.0
    %132 = vmatpush1.msra.mxu0 0.0
    %133 = vmatprep.subr.mxu0 0.0
    %134 = vmatpush1.msra.mxu0 0.0
    %135 = vmatprep.subr.mxu0 0.0
    %136 = vmatpush1.msra.mxu0 0.0
    %137 = vmatprep.subr.mxu0 0.0
    %138 = vmatpush1.msra.mxu0 0.0
    %139 = vmatprep.subr.mxu0 0.0
    %140 = vmatpush1.msra.mxu0 0.0
    %141 = vmatprep.subr.mxu0 0.0
    %142 = vmatpush1.msra.mxu0 0.0
    %143 = vmatprep.subr.mxu0 0.0
    %144 = vmatpush1.msra.mxu0 0.0
    %145 = vmatprep.subr.mxu0 0.0
    %146 = vmatpush1.msra.mxu0 0.0
    %147 = vmatprep.subr.mxu0 0.0
    %148 = vmatpush1.msra.mxu0 0.0
    %149 = vmatprep.subr.mxu0 0.0
    %150 = vmatpush1.msra.mxu0 0.0
    %151 = vmatprep.subr.mxu0 0.0
    %152 = vmatpush1.msra.mxu0 0.0
    %153 = vmatprep.subr.mxu0 0.0
    %154 = vmatpush1.msra.mxu0 0.0
    %155 = vmatprep.subr.mxu0 0.0
    %156 = vmatpush1.msra.mxu0 0.0
    %157 = vmatprep.mubr.f32.mxu0 0.0
    %158 = vmatmul.mubr.f32.gmra.mrb[0].mxu0 %v46
    %v159 = vpop.f32.mrb[0].mxu0
    %v160 = vadd.f32 0.0, %v159
    %v161 = vpop.f32.mrb[0].mxu0
    %162 = vmatprep.mubr.f32.mxu0 0.0
    %163 = vmatmul.mubr.f32.gmra.mrb[0].mxu0 %v49
    %v164 = vpop.f32.mrb[0].mxu0
    %v165 = vadd.f32 0.0, %v164
    %v166 = vpop.f32.mrb[0].mxu0
    %167 = vmatprep.mubr.f32.mxu0 0.0
    %168 = vmatmul.mubr.f32.gmra.mrb[0].mxu0 %v52
    %v169 = vpop.f32.mrb[0].mxu0
    %v170 = vadd.f32 0.0, %v169
    %v171 = vpop.f32.mrb[0].mxu0
    %172 = vmatprep.mubr.f32.mxu0 0.0
    %173 = vmatmul.mubr.f32.gmra.mrb[0].mxu0 %v55
    %v174 = vpop.f32.mrb[0].mxu0
    %v175 = vadd.f32 0.0, %v174
    %v176 = vpop.f32.mrb[0].mxu0
    %177 = vmatprep.mubr.f32.mxu0 0.0
    %178 = vmatmul.mubr.f32.gmra.mrb[0].mxu0 %v58
    %v179 = vpop.f32.mrb[0].mxu0
    %v180 = vadd.f32 0.0, %v179
    %v181 = vpop.f32.mrb[0].mxu0
    %182 = vmatprep.mubr.f32.mxu0 0.0
    %183 = vmatmul.mubr.f32.gmra.mrb[0].mxu0 %v61
    %v184 = vpop.f32.mrb[0].mxu0
    %v185 = vadd.f32 0.0, %v184
    %v186 = vpop.f32.mrb[0].mxu0
    %187 = vmatprep.mubr.f32.mxu0 0.0
    %188 = vmatmul.mubr.f32.gmra.mrb[0].mxu0 %v64
    %v189 = vpop.f32.mrb[0].mxu0
    %v190 = vadd.f32 0.0, %v189
    %v191 = vpop.f32.mrb[0].mxu0
    %192 = vmatprep.mubr.f32.mxu0 0.0
    %193 = vmatmul.mubr.f32.gmra.mrb[0].mxu0 %v67
    %v194 = vpop.f32.mrb[0].mxu0
    %v195 = vadd.f32 0.0, %v194
    %v196 = vpop.f32.mrb[0].mxu0
    %197 = vmatprep.mubr.f32.mxu0 0.0
    %198 = vmatmul.mubr.f32.gmra.mrb[0].mxu0 %v70
    %v199 = vpop.f32.mrb[0].mxu0
    %v200 = vadd.f32 0.0, %v199
    %v201 = vpop.f32.mrb[0].mxu0
    %202 = vmatprep.mubr.f32.mxu0 0.0
    %203 = vmatmul.mubr.f32.gmra.mrb[0].mxu0 %v73
    %v204 = vpop.f32.mrb[0].mxu0
    %v205 = vadd.f32 0.0, %v204
    %v206 = vpop.f32.mrb[0].mxu0
    %207 = vmatprep.mubr.f32.mxu0 0.0
    %208 = vmatmul.mubr.f32.gmra.mrb[0].mxu0 %v76
    %v209 = vpop.f32.mrb[0].mxu0
    %v210 = vadd.f32 0.0, %v209
    %v211 = vpop.f32.mrb[0].mxu0
    %212 = vmatprep.mubr.f32.mxu0 0.0
    %213 = vmatmul.mubr.f32.gmra.mrb[0].mxu0 %v79
    %v214 = vpop.f32.mrb[0].mxu0
    %v215 = vadd.f32 0.0, %v214
    %v216 = vpop.f32.mrb[0].mxu0
    %217 = vmatprep.mubr.f32.mxu0 0.0
    %218 = vmatmul.mubr.f32.gmra.mrb[0].mxu0 %v82
    %v219 = vpop.f32.mrb[0].mxu0
    %v220 = vadd.f32 0.0, %v219
    %v221 = vpop.f32.mrb[0].mxu0
    %222 = vmatprep.mubr.f32.mxu0 0.0
    %223 = vmatmul.mubr.f32.gmra.mrb[0].mxu0 %v85
    %v224 = vpop.f32.mrb[0].mxu0
    %v225 = vadd.f32 0.0, %v224
    %v226 = vpop.f32.mrb[0].mxu0
    %227 = vmatprep.mubr.f32.mxu0 0.0
    %228 = vmatmul.mubr.f32.gmra.mrb[0].mxu0 %v88
    %v229 = vpop.f32.mrb[0].mxu0
    %v230 = vadd.f32 0.0, %v229
    %v231 = vpop.f32.mrb[0].mxu0
    %232 = vmatprep.mubr.f32.mxu0 0.0
    %233 = vmatmul.mubr.f32.gmra.mrb[0].mxu0 %v91
    %v234 = vpop.f32.mrb[0].mxu0
    %v235 = vadd.f32 0.0, %v234
    %v236 = vpop.f32.mrb[0].mxu0
    %237 = vdwg.mxu0
    %v238 = vlaneseq
    %v239 = vand.u32 %v238, 127
    %v240 = vld [vmem:[%s0] sm:$0xff]
    %v241 = vld [vmem:[%s0 + $0x8] sm:$0xff]
    %v242 = vld [vmem:[%s0 + $0x10] sm:$0xff]
    %v243 = vld [vmem:[%s0 + $0x18] sm:$0xff]
    %v244 = vld [vmem:[%s0 + $0x20] sm:$0xff]
    %v245 = vld [vmem:[%s0 + $0x28] sm:$0xff]
    %v246 = vld [vmem:[%s0 + $0x30] sm:$0xff]
    %v247 = vld [vmem:[%s0 + $0x38] sm:$0xff]
    %v248 = vld [vmem:[%s0 + $0x40] sm:$0xff]
    %v249 = vld [vmem:[%s0 + $0x48] sm:$0xff]
    %v250 = vld [vmem:[%s0 + $0x50] sm:$0xff]
    %v251 = vld [vmem:[%s0 + $0x58] sm:$0xff]
    %v252 = vld [vmem:[%s0 + $0x60] sm:$0xff]
    %v253 = vld [vmem:[%s0 + $0x68] sm:$0xff]
    %v254 = vld [vmem:[%s0 + $0x70] sm:$0xff]
    %v255 = vld [vmem:[%s0 + $0x78] sm:$0xff]
    %256 = vset.pattern.permute.xlu0 0
    %257 = vperm.xlu0 %256, %v240
    %v258 = vpop.permute.xlu0 %257
    %259 = vset.pattern.permute.xlu0 0
    %260 = vperm.xlu0 %259, %v241
    %v261 = vpop.permute.xlu0 %260
    %262 = vset.pattern.permute.xlu0 0
    %263 = vperm.xlu0 %262, %v242
    %v264 = vpop.permute.xlu0 %263
    %265 = vset.pattern.permute.xlu0 0
    %266 = vperm.xlu0 %265, %v243
    %v267 = vpop.permute.xlu0 %266
    %268 = vset.pattern.permute.xlu0 0
    %269 = vperm.xlu0 %268, %v244
    %v270 = vpop.permute.xlu0 %269
    %271 = vset.pattern.permute.xlu0 0
    %272 = vperm.xlu0 %271, %v245
    %v273 = vpop.permute.xlu0 %272
    %274 = vset.pattern.permute.xlu0 0
    %275 = vperm.xlu0 %274, %v246
    %v276 = vpop.permute.xlu0 %275
    %277 = vset.pattern.permute.xlu0 0
    %278 = vperm.xlu0 %277, %v247
    %v279 = vpop.permute.xlu0 %278
    %280 = vset.pattern.permute.xlu0 0
    %281 = vperm.xlu0 %280, %v248
    %v282 = vpop.permute.xlu0 %281
    %283 = vset.pattern.permute.xlu0 0
    %284 = vperm.xlu0 %283, %v249
    %v285 = vpop.permute.xlu0 %284
    %286 = vset.pattern.permute.xlu0 0
    %287 = vperm.xlu0 %286, %v250
    %v288 = vpop.permute.xlu0 %287
    %289 = vset.pattern.permute.xlu0 0
    %290 = vperm.xlu0 %289, %v251
    %v291 = vpop.permute.xlu0 %290
    %292 = vset.pattern.permute.xlu0 0
    %293 = vperm.xlu0 %292, %v252
    %v294 = vpop.permute.xlu0 %293
    %295 = vset.pattern.permute.xlu0 0
    %296 = vperm.xlu0 %295, %v253
    %v297 = vpop.permute.xlu0 %296
    %298 = vset.pattern.permute.xlu0 0
    %299 = vperm.xlu0 %298, %v254
    %v300 = vpop.permute.xlu0 %299
    %301 = vset.pattern.permute.xlu0 0
    %302 = vperm.xlu0 %301, %v255
    %v303 = vpop.permute.xlu0 %302
    %vm304 = vcmp.eq.s32.totalorder %v239, %v258
    %vm305 = vcmp.eq.s32.totalorder %v239, %v261
    %vm306 = vcmp.eq.s32.totalorder %v239, %v264
    %vm307 = vcmp.eq.s32.totalorder %v239, %v267
    %vm308 = vcmp.eq.s32.totalorder %v239, %v270
    %vm309 = vcmp.eq.s32.totalorder %v239, %v273
    %vm310 = vcmp.eq.s32.totalorder %v239, %v276
    %vm311 = vcmp.eq.s32.totalorder %v239, %v279
    %vm312 = vcmp.eq.s32.totalorder %v239, %v282
    %vm313 = vcmp.eq.s32.totalorder %v239, %v285
    %vm314 = vcmp.eq.s32.totalorder %v239, %v288
    %vm315 = vcmp.eq.s32.totalorder %v239, %v291
    %vm316 = vcmp.eq.s32.totalorder %v239, %v294
    %vm317 = vcmp.eq.s32.totalorder %v239, %v297
    %vm318 = vcmp.eq.s32.totalorder %v239, %v300
    %vm319 = vcmp.eq.s32.totalorder %v239, %v303
    %v320 = vsel %vm304, %v160, 0.0
    %v321 = vsel %vm305, %v165, 0.0
    %v322 = vsel %vm306, %v170, 0.0
    %v323 = vsel %vm307, %v175, 0.0
    %v324 = vsel %vm308, %v180, 0.0
    %v325 = vsel %vm309, %v185, 0.0
    %v326 = vsel %vm310, %v190, 0.0
    %v327 = vsel %vm311, %v195, 0.0
    %v328 = vsel %vm312, %v200, 0.0
    %v329 = vsel %vm313, %v205, 0.0
    %v330 = vsel %vm314, %v210, 0.0
    %v331 = vsel %vm315, %v215, 0.0
    %v332 = vsel %vm316, %v220, 0.0
    %v333 = vsel %vm317, %v225, 0.0
    %v334 = vsel %vm318, %v230, 0.0
    %v335 = vsel %vm319, %v235, 0.0
    %v336 = vsel %vm44, %v320, 0.0
    %337 = vadd.xlane.f32.xlu0 %v336
    %v338 = vpop.xlane.xlu0 %337
    %v339 = vsel %vm44, %v321, 0.0
    %340 = vadd.xlane.f32.xlu0 %v339
    %v341 = vpop.xlane.xlu0 %340
    %v342 = vsel %vm44, %v322, 0.0
    %343 = vadd.xlane.f32.xlu0 %v342
    %v344 = vpop.xlane.xlu0 %343
    %v345 = vsel %vm44, %v323, 0.0
    %346 = vadd.xlane.f32.xlu0 %v345
    %v347 = vpop.xlane.xlu0 %346
    %v348 = vsel %vm44, %v324, 0.0
    %349 = vadd.xlane.f32.xlu0 %v348
    %v350 = vpop.xlane.xlu0 %349
    %v351 = vsel %vm44, %v325, 0.0
    %352 = vadd.xlane.f32.xlu0 %v351
    %v353 = vpop.xlane.xlu0 %352
    %v354 = vsel %vm44, %v326, 0.0
    %355 = vadd.xlane.f32.xlu0 %v354
    %v356 = vpop.xlane.xlu0 %355
    %v357 = vsel %vm44, %v327, 0.0
    %358 = vadd.xlane.f32.xlu0 %v357
    %v359 = vpop.xlane.xlu0 %358
    %v360 = vsel %vm44, %v328, 0.0
    %361 = vadd.xlane.f32.xlu0 %v360
    %v362 = vpop.xlane.xlu0 %361
    %v363 = vsel %vm44, %v329, 0.0
    %364 = vadd.xlane.f32.xlu0 %v363
    %v365 = vpop.xlane.xlu0 %364
    %v366 = vsel %vm44, %v330, 0.0
    %367 = vadd.xlane.f32.xlu0 %v366
    %v368 = vpop.xlane.xlu0 %367
    %v369 = vsel %vm44, %v331, 0.0
    %370 = vadd.xlane.f32.xlu0 %v369
    %v371 = vpop.xlane.xlu0 %370
    %v372 = vsel %vm44, %v332, 0.0
    %373 = vadd.xlane.f32.xlu0 %v372
    %v374 = vpop.xlane.xlu0 %373
    %v375 = vsel %vm44, %v333, 0.0
    %376 = vadd.xlane.f32.xlu0 %v375
    %v377 = vpop.xlane.xlu0 %376
    %v378 = vsel %vm44, %v334, 0.0
    %379 = vadd.xlane.f32.xlu0 %v378
    %v380 = vpop.xlane.xlu0 %379
    %v381 = vsel %vm44, %v335, 0.0
    %382 = vadd.xlane.f32.xlu0 %v381
    %v383 = vpop.xlane.xlu0 %382
    %v384 = vmin.f32 %v338, 0.0
    %v385 = vmin.f32 %v341, 0.0
    %v386 = vmin.f32 %v344, 0.0
    %v387 = vmin.f32 %v347, 0.0
    %v388 = vmin.f32 %v350, 0.0
    %v389 = vmin.f32 %v353, 0.0
    %v390 = vmin.f32 %v356, 0.0
    %v391 = vmin.f32 %v359, 0.0
    %v392 = vmin.f32 %v362, 0.0
    %v393 = vmin.f32 %v365, 0.0
    %v394 = vmin.f32 %v368, 0.0
    %v395 = vmin.f32 %v371, 0.0
    %v396 = vmin.f32 %v374, 0.0
    %v397 = vmin.f32 %v377, 0.0
    %v398 = vmin.f32 %v380, 0.0
    %v399 = vmin.f32 %v383, 0.0
    %v400 = vand.u32 2147483647, %v338
    %v401 = vand.u32 2147483647, %v341
    %v402 = vand.u32 2147483647, %v344
    %v403 = vand.u32 2147483647, %v347
    %v404 = vand.u32 2147483647, %v350
    %v405 = vand.u32 2147483647, %v353
    %v406 = vand.u32 2147483647, %v356
    %v407 = vand.u32 2147483647, %v359
    %v408 = vand.u32 2147483647, %v362
    %v409 = vand.u32 2147483647, %v365
    %v410 = vand.u32 2147483647, %v368
    %v411 = vand.u32 2147483647, %v371
    %v412 = vand.u32 2147483647, %v374
    %v413 = vand.u32 2147483647, %v377
    %v414 = vand.u32 2147483647, %v380
    %v415 = vand.u32 2147483647, %v383
    %v416 = vsub.f32 0.0, %v400
    %v417 = vsub.f32 0.0, %v401
    %v418 = vsub.f32 0.0, %v402
    %v419 = vsub.f32 0.0, %v403
    %v420 = vsub.f32 0.0, %v404
    %v421 = vsub.f32 0.0, %v405
    %v422 = vsub.f32 0.0, %v406
    %v423 = vsub.f32 0.0, %v407
    %v424 = vsub.f32 0.0, %v408
    %v425 = vsub.f32 0.0, %v409
    %v426 = vsub.f32 0.0, %v410
    %v427 = vsub.f32 0.0, %v411
    %v428 = vsub.f32 0.0, %v412
    %v429 = vsub.f32 0.0, %v413
    %v430 = vsub.f32 0.0, %v414
    %v431 = vsub.f32 0.0, %v415
    %v432 = vmul.f32 %v416, 1.442695
    %v433 = vpow.pop %v432
    %v434 = vmul.f32 %v417, 1.442695
    %v435 = vpow.pop %v434
    %v436 = vmul.f32 %v418, 1.442695
    %v437 = vpow.pop %v436
    %v438 = vmul.f32 %v419, 1.442695
    %v439 = vpow.pop %v438
    %v440 = vmul.f32 %v420, 1.442695
    %v441 = vpow.pop %v440
    %v442 = vmul.f32 %v421, 1.442695
    %v443 = vpow.pop %v442
    %v444 = vmul.f32 %v422, 1.442695
    %v445 = vpow.pop %v444
    %v446 = vmul.f32 %v423, 1.442695
    %v447 = vpow.pop %v446
    %v448 = vmul.f32 %v424, 1.442695
    %v449 = vpow.pop %v448
    %v450 = vmul.f32 %v425, 1.442695
    %v451 = vpow.pop %v450
    %v452 = vmul.f32 %v426, 1.442695
    %v453 = vpow.pop %v452
    %v454 = vmul.f32 %v427, 1.442695
    %v455 = vpow.pop %v454
    %v456 = vmul.f32 %v428, 1.442695
    %v457 = vpow.pop %v456
    %v458 = vmul.f32 %v429, 1.442695
    %v459 = vpow.pop %v458
    %v460 = vmul.f32 %v430, 1.442695
    %v461 = vpow.pop %v460
    %v462 = vmul.f32 %v431, 1.442695
    %v463 = vpow.pop %v462
    %v464 = vadd.f32 %v433, 1.0
    %v465 = vlog2.pop %v464
    %v466 = vmul.f32 %v465, 0.6931472
    %v467 = vmul.f32 -0.5, %v433
    %v468 = vadd.f32 %v467, 1.0
    %v469 = vmul.f32 %v468, %v433
    %v470 = vand.u32 2147483647, %v433
    %vm471 = vcmp.lt.f32.partialorder %v470, 0.0004427343
    %v472 = vsel %vm471, %v469, %v466
    %v473 = vadd.f32 %v435, 1.0
    %v474 = vlog2.pop %v473
    %v475 = vmul.f32 %v474, 0.6931472
    %v476 = vmul.f32 -0.5, %v435
    %v477 = vadd.f32 %v476, 1.0
    %v478 = vmul.f32 %v477, %v435
    %v479 = vand.u32 2147483647, %v435
    %vm480 = vcmp.lt.f32.partialorder %v479, 0.0004427343
    %v481 = vsel %vm480, %v478, %v475
    %v482 = vadd.f32 %v437, 1.0
    %v483 = vlog2.pop %v482
    %v484 = vmul.f32 %v483, 0.6931472
    %v485 = vmul.f32 -0.5, %v437
    %v486 = vadd.f32 %v485, 1.0
    %v487 = vmul.f32 %v486, %v437
    %v488 = vand.u32 2147483647, %v437
    %vm489 = vcmp.lt.f32.partialorder %v488, 0.0004427343
    %v490 = vsel %vm489, %v487, %v484
    %v491 = vadd.f32 %v439, 1.0
    %v492 = vlog2.pop %v491
    %v493 = vmul.f32 %v492, 0.6931472
    %v494 = vmul.f32 -0.5, %v439
    %v495 = vadd.f32 %v494, 1.0
    %v496 = vmul.f32 %v495, %v439
    %v497 = vand.u32 2147483647, %v439
    %vm498 = vcmp.lt.f32.partialorder %v497, 0.0004427343
    %v499 = vsel %vm498, %v496, %v493
    %v500 = vadd.f32 %v441, 1.0
    %v501 = vlog2.pop %v500
    %v502 = vmul.f32 %v501, 0.6931472
    %v503 = vmul.f32 -0.5, %v441
    %v504 = vadd.f32 %v503, 1.0
    %v505 = vmul.f32 %v504, %v441
    %v506 = vand.u32 2147483647, %v441
    %vm507 = vcmp.lt.f32.partialorder %v506, 0.0004427343
    %v508 = vsel %vm507, %v505, %v502
    %v509 = vadd.f32 %v443, 1.0
    %v510 = vlog2.pop %v509
    %v511 = vmul.f32 %v510, 0.6931472
    %v512 = vmul.f32 -0.5, %v443
    %v513 = vadd.f32 %v512, 1.0
    %v514 = vmul.f32 %v513, %v443
    %v515 = vand.u32 2147483647, %v443
    %vm516 = vcmp.lt.f32.partialorder %v515, 0.0004427343
    %v517 = vsel %vm516, %v514, %v511
    %v518 = vadd.f32 %v445, 1.0
    %v519 = vlog2.pop %v518
    %v520 = vmul.f32 %v519, 0.6931472
    %v521 = vmul.f32 -0.5, %v445
    %v522 = vadd.f32 %v521, 1.0
    %v523 = vmul.f32 %v522, %v445
    %v524 = vand.u32 2147483647, %v445
    %vm525 = vcmp.lt.f32.partialorder %v524, 0.0004427343
    %v526 = vsel %vm525, %v523, %v520
    %v527 = vadd.f32 %v447, 1.0
    %v528 = vlog2.pop %v527
    %v529 = vmul.f32 %v528, 0.6931472
    %v530 = vmul.f32 -0.5, %v447
    %v531 = vadd.f32 %v530, 1.0
    %v532 = vmul.f32 %v531, %v447
    %v533 = vand.u32 2147483647, %v447
    %vm534 = vcmp.lt.f32.partialorder %v533, 0.0004427343
    %v535 = vsel %vm534, %v532, %v529
    %v536 = vadd.f32 %v449, 1.0
    %v537 = vlog2.pop %v536
    %v538 = vmul.f32 %v537, 0.6931472
    %v539 = vmul.f32 -0.5, %v449
    %v540 = vadd.f32 %v539, 1.0
    %v541 = vmul.f32 %v540, %v449
    %v542 = vand.u32 2147483647, %v449
    %vm543 = vcmp.lt.f32.partialorder %v542, 0.0004427343
    %v544 = vsel %vm543, %v541, %v538
    %v545 = vadd.f32 %v451, 1.0
    %v546 = vlog2.pop %v545
    %v547 = vmul.f32 %v546, 0.6931472
    %v548 = vmul.f32 -0.5, %v451
    %v549 = vadd.f32 %v548, 1.0
    %v550 = vmul.f32 %v549, %v451
    %v551 = vand.u32 2147483647, %v451
    %vm552 = vcmp.lt.f32.partialorder %v551, 0.0004427343
    %v553 = vsel %vm552, %v550, %v547
    %v554 = vadd.f32 %v453, 1.0
    %v555 = vlog2.pop %v554
    %v556 = vmul.f32 %v555, 0.6931472
    %v557 = vmul.f32 -0.5, %v453
    %v558 = vadd.f32 %v557, 1.0
    %v559 = vmul.f32 %v558, %v453
    %v560 = vand.u32 2147483647, %v453
    %vm561 = vcmp.lt.f32.partialorder %v560, 0.0004427343
    %v562 = vsel %vm561, %v559, %v556
    %v563 = vadd.f32 %v455, 1.0
    %v564 = vlog2.pop %v563
    %v565 = vmul.f32 %v564, 0.6931472
    %v566 = vmul.f32 -0.5, %v455
    %v567 = vadd.f32 %v566, 1.0
    %v568 = vmul.f32 %v567, %v455
    %v569 = vand.u32 2147483647, %v455
    %vm570 = vcmp.lt.f32.partialorder %v569, 0.0004427343
    %v571 = vsel %vm570, %v568, %v565
    %v572 = vadd.f32 %v457, 1.0
    %v573 = vlog2.pop %v572
    %v574 = vmul.f32 %v573, 0.6931472
    %v575 = vmul.f32 -0.5, %v457
    %v576 = vadd.f32 %v575, 1.0
    %v577 = vmul.f32 %v576, %v457
    %v578 = vand.u32 2147483647, %v457
    %vm579 = vcmp.lt.f32.partialorder %v578, 0.0004427343
    %v580 = vsel %vm579, %v577, %v574
    %v581 = vadd.f32 %v459, 1.0
    %v582 = vlog2.pop %v581
    %v583 = vmul.f32 %v582, 0.6931472
    %v584 = vmul.f32 -0.5, %v459
    %v585 = vadd.f32 %v584, 1.0
    %v586 = vmul.f32 %v585, %v459
    %v587 = vand.u32 2147483647, %v459
    %vm588 = vcmp.lt.f32.partialorder %v587, 0.0004427343
    %v589 = vsel %vm588, %v586, %v583
    %v590 = vadd.f32 %v461, 1.0
    %v591 = vlog2.pop %v590
    %v592 = vmul.f32 %v591, 0.6931472
    %v593 = vmul.f32 -0.5, %v461
    %v594 = vadd.f32 %v593, 1.0
    %v595 = vmul.f32 %v594, %v461
    %v596 = vand.u32 2147483647, %v461
    %vm597 = vcmp.lt.f32.partialorder %v596, 0.0004427343
    %v598 = vsel %vm597, %v595, %v592
    %v599 = vadd.f32 %v463, 1.0
    %v600 = vlog2.pop %v599
    %v601 = vmul.f32 %v600, 0.6931472
    %v602 = vmul.f32 -0.5, %v463
    %v603 = vadd.f32 %v602, 1.0
    %v604 = vmul.f32 %v603, %v463
    %v605 = vand.u32 2147483647, %v463
    %vm606 = vcmp.lt.f32.partialorder %v605, 0.0004427343
    %v607 = vsel %vm606, %v604, %v601
    %v608 = vsub.f32 %v384, %v472
    %v609 = vsub.f32 %v385, %v481
    %v610 = vsub.f32 %v386, %v490
    %v611 = vsub.f32 %v387, %v499
    %v612 = vsub.f32 %v388, %v508
    %v613 = vsub.f32 %v389, %v517
    %v614 = vsub.f32 %v390, %v526
    %v615 = vsub.f32 %v391, %v535
    %v616 = vsub.f32 %v392, %v544
    %v617 = vsub.f32 %v393, %v553
    %v618 = vsub.f32 %v394, %v562
    %v619 = vsub.f32 %v395, %v571
    %v620 = vsub.f32 %v396, %v580
    %v621 = vsub.f32 %v397, %v589
    %v622 = vsub.f32 %v398, %v598
    %v623 = vsub.f32 %v399, %v607
    %v624 = vld [vmem:[%s1] sm:$0xff]
    %v625 = vld [vmem:[%s1 + $0x8] sm:$0xff]
    %v626 = vld [vmem:[%s1 + $0x10] sm:$0xff]
    %v627 = vld [vmem:[%s1 + $0x18] sm:$0xff]
    %v628 = vld [vmem:[%s1 + $0x20] sm:$0xff]
    %v629 = vld [vmem:[%s1 + $0x28] sm:$0xff]
    %v630 = vld [vmem:[%s1 + $0x30] sm:$0xff]
    %v631 = vld [vmem:[%s1 + $0x38] sm:$0xff]
    %v632 = vld [vmem:[%s1 + $0x40] sm:$0xff]
    %v633 = vld [vmem:[%s1 + $0x48] sm:$0xff]
    %v634 = vld [vmem:[%s1 + $0x50] sm:$0xff]
    %v635 = vld [vmem:[%s1 + $0x58] sm:$0xff]
    %v636 = vld [vmem:[%s1 + $0x60] sm:$0xff]
    %v637 = vld [vmem:[%s1 + $0x68] sm:$0xff]
    %v638 = vld [vmem:[%s1 + $0x70] sm:$0xff]
    %v639 = vld [vmem:[%s1 + $0x78] sm:$0xff]
    %640 = vset.pattern.permute.xlu0 0
    %641 = vperm.xlu0 %640, %v624
    %v642 = vpop.permute.xlu0 %641
    %643 = vset.pattern.permute.xlu0 0
    %644 = vperm.xlu0 %643, %v625
    %v645 = vpop.permute.xlu0 %644
    %646 = vset.pattern.permute.xlu0 0
    %647 = vperm.xlu0 %646, %v626
    %v648 = vpop.permute.xlu0 %647
    %649 = vset.pattern.permute.xlu0 0
    %650 = vperm.xlu0 %649, %v627
    %v651 = vpop.permute.xlu0 %650
    %652 = vset.pattern.permute.xlu0 0
    %653 = vperm.xlu0 %652, %v628
    %v654 = vpop.permute.xlu0 %653
    %655 = vset.pattern.permute.xlu0 0
    %656 = vperm.xlu0 %655, %v629
    %v657 = vpop.permute.xlu0 %656
    %658 = vset.pattern.permute.xlu0 0
    %659 = vperm.xlu0 %658, %v630
    %v660 = vpop.permute.xlu0 %659
    %661 = vset.pattern.permute.xlu0 0
    %662 = vperm.xlu0 %661, %v631
    %v663 = vpop.permute.xlu0 %662
    %664 = vset.pattern.permute.xlu0 0
    %665 = vperm.xlu0 %664, %v632
    %v666 = vpop.permute.xlu0 %665
    %667 = vset.pattern.permute.xlu0 0
    %668 = vperm.xlu0 %667, %v633
    %v669 = vpop.permute.xlu0 %668
    %670 = vset.pattern.permute.xlu0 0
    %671 = vperm.xlu0 %670, %v634
    %v672 = vpop.permute.xlu0 %671
    %673 = vset.pattern.permute.xlu0 0
    %674 = vperm.xlu0 %673, %v635
    %v675 = vpop.permute.xlu0 %674
    %676 = vset.pattern.permute.xlu0 0
    %677 = vperm.xlu0 %676, %v636
    %v678 = vpop.permute.xlu0 %677
    %679 = vset.pattern.permute.xlu0 0
    %680 = vperm.xlu0 %679, %v637
    %v681 = vpop.permute.xlu0 %680
    %682 = vset.pattern.permute.xlu0 0
    %683 = vperm.xlu0 %682, %v638
    %v684 = vpop.permute.xlu0 %683
    %685 = vset.pattern.permute.xlu0 0
    %686 = vperm.xlu0 %685, %v639
    %v687 = vpop.permute.xlu0 %686
    %vm688 = vcmp.eq.s32.totalorder %v239, %v642
    %vm689 = vcmp.eq.s32.totalorder %v239, %v645
    %vm690 = vcmp.eq.s32.totalorder %v239, %v648
    %vm691 = vcmp.eq.s32.totalorder %v239, %v651
    %vm692 = vcmp.eq.s32.totalorder %v239, %v654
    %vm693 = vcmp.eq.s32.totalorder %v239, %v657
    %vm694 = vcmp.eq.s32.totalorder %v239, %v660
    %vm695 = vcmp.eq.s32.totalorder %v239, %v663
    %vm696 = vcmp.eq.s32.totalorder %v239, %v666
    %vm697 = vcmp.eq.s32.totalorder %v239, %v669
    %vm698 = vcmp.eq.s32.totalorder %v239, %v672
    %vm699 = vcmp.eq.s32.totalorder %v239, %v675
    %vm700 = vcmp.eq.s32.totalorder %v239, %v678
    %vm701 = vcmp.eq.s32.totalorder %v239, %v681
    %vm702 = vcmp.eq.s32.totalorder %v239, %v684
    %vm703 = vcmp.eq.s32.totalorder %v239, %v687
    %v704 = vsel %vm688, %v160, 0.0
    %v705 = vsel %vm689, %v165, 0.0
    %v706 = vsel %vm690, %v170, 0.0
    %v707 = vsel %vm691, %v175, 0.0
    %v708 = vsel %vm692, %v180, 0.0
    %v709 = vsel %vm693, %v185, 0.0
    %v710 = vsel %vm694, %v190, 0.0
    %v711 = vsel %vm695, %v195, 0.0
    %v712 = vsel %vm696, %v200, 0.0
    %v713 = vsel %vm697, %v205, 0.0
    %v714 = vsel %vm698, %v210, 0.0
    %v715 = vsel %vm699, %v215, 0.0
    %v716 = vsel %vm700, %v220, 0.0
    %v717 = vsel %vm701, %v225, 0.0
    %v718 = vsel %vm702, %v230, 0.0
    %v719 = vsel %vm703, %v235, 0.0
    %v720 = vsel %vm44, %v704, 0.0
    %721 = vadd.xlane.f32.xlu0 %v720
    %v722 = vpop.xlane.xlu0 %721
    %v723 = vsel %vm44, %v705, 0.0
    %724 = vadd.xlane.f32.xlu0 %v723
    %v725 = vpop.xlane.xlu0 %724
    %v726 = vsel %vm44, %v706, 0.0
    %727 = vadd.xlane.f32.xlu0 %v726
    %v728 = vpop.xlane.xlu0 %727
    %v729 = vsel %vm44, %v707, 0.0
    %730 = vadd.xlane.f32.xlu0 %v729
    %v731 = vpop.xlane.xlu0 %730
    %v732 = vsel %vm44, %v708, 0.0
    %733 = vadd.xlane.f32.xlu0 %v732
    %v734 = vpop.xlane.xlu0 %733
    %v735 = vsel %vm44, %v709, 0.0
    %736 = vadd.xlane.f32.xlu0 %v735
    %v737 = vpop.xlane.xlu0 %736
    %v738 = vsel %vm44, %v710, 0.0
    %739 = vadd.xlane.f32.xlu0 %v738
    %v740 = vpop.xlane.xlu0 %739
    %v741 = vsel %vm44, %v711, 0.0
    %742 = vadd.xlane.f32.xlu0 %v741
    %v743 = vpop.xlane.xlu0 %742
    %v744 = vsel %vm44, %v712, 0.0
    %745 = vadd.xlane.f32.xlu0 %v744
    %v746 = vpop.xlane.xlu0 %745
    %v747 = vsel %vm44, %v713, 0.0
    %748 = vadd.xlane.f32.xlu0 %v747
    %v749 = vpop.xlane.xlu0 %748
    %v750 = vsel %vm44, %v714, 0.0
    %751 = vadd.xlane.f32.xlu0 %v750
    %v752 = vpop.xlane.xlu0 %751
    %v753 = vsel %vm44, %v715, 0.0
    %754 = vadd.xlane.f32.xlu0 %v753
    %v755 = vpop.xlane.xlu0 %754
    %v756 = vsel %vm44, %v716, 0.0
    %757 = vadd.xlane.f32.xlu0 %v756
    %v758 = vpop.xlane.xlu0 %757
    %v759 = vsel %vm44, %v717, 0.0
    %760 = vadd.xlane.f32.xlu0 %v759
    %v761 = vpop.xlane.xlu0 %760
    %v762 = vsel %vm44, %v718, 0.0
    %763 = vadd.xlane.f32.xlu0 %v762
    %v764 = vpop.xlane.xlu0 %763
    %v765 = vsel %vm44, %v719, 0.0
    %766 = vadd.xlane.f32.xlu0 %v765
    %v767 = vpop.xlane.xlu0 %766
    %v768 = vsub.f32 0.0, %v722
    %v769 = vsub.f32 0.0, %v725
    %v770 = vsub.f32 0.0, %v728
    %v771 = vsub.f32 0.0, %v731
    %v772 = vsub.f32 0.0, %v734
    %v773 = vsub.f32 0.0, %v737
    %v774 = vsub.f32 0.0, %v740
    %v775 = vsub.f32 0.0, %v743
    %v776 = vsub.f32 0.0, %v746
    %v777 = vsub.f32 0.0, %v749
    %v778 = vsub.f32 0.0, %v752
    %v779 = vsub.f32 0.0, %v755
    %v780 = vsub.f32 0.0, %v758
    %v781 = vsub.f32 0.0, %v761
    %v782 = vsub.f32 0.0, %v764
    %v783 = vsub.f32 0.0, %v767
    %v784 = vmin.f32 %v768, 0.0
    %v785 = vmin.f32 %v769, 0.0
    %v786 = vmin.f32 %v770, 0.0
    %v787 = vmin.f32 %v771, 0.0
    %v788 = vmin.f32 %v772, 0.0
    %v789 = vmin.f32 %v773, 0.0
    %v790 = vmin.f32 %v774, 0.0
    %v791 = vmin.f32 %v775, 0.0
    %v792 = vmin.f32 %v776, 0.0
    %v793 = vmin.f32 %v777, 0.0
    %v794 = vmin.f32 %v778, 0.0
    %v795 = vmin.f32 %v779, 0.0
    %v796 = vmin.f32 %v780, 0.0
    %v797 = vmin.f32 %v781, 0.0
    %v798 = vmin.f32 %v782, 0.0
    %v799 = vmin.f32 %v783, 0.0
    %v800 = vand.u32 2147483647, %v768
    %v801 = vand.u32 2147483647, %v769
    %v802 = vand.u32 2147483647, %v770
    %v803 = vand.u32 2147483647, %v771
    %v804 = vand.u32 2147483647, %v772
    %v805 = vand.u32 2147483647, %v773
    %v806 = vand.u32 2147483647, %v774
    %v807 = vand.u32 2147483647, %v775
    %v808 = vand.u32 2147483647, %v776
    %v809 = vand.u32 2147483647, %v777
    %v810 = vand.u32 2147483647, %v778
    %v811 = vand.u32 2147483647, %v779
    %v812 = vand.u32 2147483647, %v780
    %v813 = vand.u32 2147483647, %v781
    %v814 = vand.u32 2147483647, %v782
    %v815 = vand.u32 2147483647, %v783
    %v816 = vsub.f32 0.0, %v800
    %v817 = vsub.f32 0.0, %v801
    %v818 = vsub.f32 0.0, %v802
    %v819 = vsub.f32 0.0, %v803
    %v820 = vsub.f32 0.0, %v804
    %v821 = vsub.f32 0.0, %v805
    %v822 = vsub.f32 0.0, %v806
    %v823 = vsub.f32 0.0, %v807
    %v824 = vsub.f32 0.0, %v808
    %v825 = vsub.f32 0.0, %v809
    %v826 = vsub.f32 0.0, %v810
    %v827 = vsub.f32 0.0, %v811
    %v828 = vsub.f32 0.0, %v812
    %v829 = vsub.f32 0.0, %v813
    %v830 = vsub.f32 0.0, %v814
    %v831 = vsub.f32 0.0, %v815
    %v832 = vmul.f32 %v816, 1.442695
    %v833 = vpow.pop %v832
    %v834 = vmul.f32 %v817, 1.442695
    %v835 = vpow.pop %v834
    %v836 = vmul.f32 %v818, 1.442695
    %v837 = vpow.pop %v836
    %v838 = vmul.f32 %v819, 1.442695
    %v839 = vpow.pop %v838
    %v840 = vmul.f32 %v820, 1.442695
    %v841 = vpow.pop %v840
    %v842 = vmul.f32 %v821, 1.442695
    %v843 = vpow.pop %v842
    %v844 = vmul.f32 %v822, 1.442695
    %v845 = vpow.pop %v844
    %v846 = vmul.f32 %v823, 1.442695
    %v847 = vpow.pop %v846
    %v848 = vmul.f32 %v824, 1.442695
    %v849 = vpow.pop %v848
    %v850 = vmul.f32 %v825, 1.442695
    %v851 = vpow.pop %v850
    %v852 = vmul.f32 %v826, 1.442695
    %v853 = vpow.pop %v852
    %v854 = vmul.f32 %v827, 1.442695
    %v855 = vpow.pop %v854
    %v856 = vmul.f32 %v828, 1.442695
    %v857 = vpow.pop %v856
    %v858 = vmul.f32 %v829, 1.442695
    %v859 = vpow.pop %v858
    %v860 = vmul.f32 %v830, 1.442695
    %v861 = vpow.pop %v860
    %v862 = vmul.f32 %v831, 1.442695
    %v863 = vpow.pop %v862
    %v864 = vadd.f32 %v833, 1.0
    %v865 = vlog2.pop %v864
    %v866 = vmul.f32 %v865, 0.6931472
    %v867 = vmul.f32 -0.5, %v833
    %v868 = vadd.f32 %v867, 1.0
    %v869 = vmul.f32 %v868, %v833
    %v870 = vand.u32 2147483647, %v833
    %vm871 = vcmp.lt.f32.partialorder %v870, 0.0004427343
    %v872 = vsel %vm871, %v869, %v866
    %v873 = vadd.f32 %v835, 1.0
    %v874 = vlog2.pop %v873
    %v875 = vmul.f32 %v874, 0.6931472
    %v876 = vmul.f32 -0.5, %v835
    %v877 = vadd.f32 %v876, 1.0
    %v878 = vmul.f32 %v877, %v835
    %v879 = vand.u32 2147483647, %v835
    %vm880 = vcmp.lt.f32.partialorder %v879, 0.0004427343
    %v881 = vsel %vm880, %v878, %v875
    %v882 = vadd.f32 %v837, 1.0
    %v883 = vlog2.pop %v882
    %v884 = vmul.f32 %v883, 0.6931472
    %v885 = vmul.f32 -0.5, %v837
    %v886 = vadd.f32 %v885, 1.0
    %v887 = vmul.f32 %v886, %v837
    %v888 = vand.u32 2147483647, %v837
    %vm889 = vcmp.lt.f32.partialorder %v888, 0.0004427343
    %v890 = vsel %vm889, %v887, %v884
    %v891 = vadd.f32 %v839, 1.0
    %v892 = vlog2.pop %v891
    %v893 = vmul.f32 %v892, 0.6931472
    %v894 = vmul.f32 -0.5, %v839
    %v895 = vadd.f32 %v894, 1.0
    %v896 = vmul.f32 %v895, %v839
    %v897 = vand.u32 2147483647, %v839
    %vm898 = vcmp.lt.f32.partialorder %v897, 0.0004427343
    %v899 = vsel %vm898, %v896, %v893
    %v900 = vadd.f32 %v841, 1.0
    %v901 = vlog2.pop %v900
    %v902 = vmul.f32 %v901, 0.6931472
    %v903 = vmul.f32 -0.5, %v841
    %v904 = vadd.f32 %v903, 1.0
    %v905 = vmul.f32 %v904, %v841
    %v906 = vand.u32 2147483647, %v841
    %vm907 = vcmp.lt.f32.partialorder %v906, 0.0004427343
    %v908 = vsel %vm907, %v905, %v902
    %v909 = vadd.f32 %v843, 1.0
    %v910 = vlog2.pop %v909
    %v911 = vmul.f32 %v910, 0.6931472
    %v912 = vmul.f32 -0.5, %v843
    %v913 = vadd.f32 %v912, 1.0
    %v914 = vmul.f32 %v913, %v843
    %v915 = vand.u32 2147483647, %v843
    %vm916 = vcmp.lt.f32.partialorder %v915, 0.0004427343
    %v917 = vsel %vm916, %v914, %v911
    %v918 = vadd.f32 %v845, 1.0
    %v919 = vlog2.pop %v918
    %v920 = vmul.f32 %v919, 0.6931472
    %v921 = vmul.f32 -0.5, %v845
    %v922 = vadd.f32 %v921, 1.0
    %v923 = vmul.f32 %v922, %v845
    %v924 = vand.u32 2147483647, %v845
    %vm925 = vcmp.lt.f32.partialorder %v924, 0.0004427343
    %v926 = vsel %vm925, %v923, %v920
    %v927 = vadd.f32 %v847, 1.0
    %v928 = vlog2.pop %v927
    %v929 = vmul.f32 %v928, 0.6931472
    %v930 = vmul.f32 -0.5, %v847
    %v931 = vadd.f32 %v930, 1.0
    %v932 = vmul.f32 %v931, %v847
    %v933 = vand.u32 2147483647, %v847
    %vm934 = vcmp.lt.f32.partialorder %v933, 0.0004427343
    %v935 = vsel %vm934, %v932, %v929
    %v936 = vadd.f32 %v849, 1.0
    %v937 = vlog2.pop %v936
    %v938 = vmul.f32 %v937, 0.6931472
    %v939 = vmul.f32 -0.5, %v849
    %v940 = vadd.f32 %v939, 1.0
    %v941 = vmul.f32 %v940, %v849
    %v942 = vand.u32 2147483647, %v849
    %vm943 = vcmp.lt.f32.partialorder %v942, 0.0004427343
    %v944 = vsel %vm943, %v941, %v938
    %v945 = vadd.f32 %v851, 1.0
    %v946 = vlog2.pop %v945
    %v947 = vmul.f32 %v946, 0.6931472
    %v948 = vmul.f32 -0.5, %v851
    %v949 = vadd.f32 %v948, 1.0
    %v950 = vmul.f32 %v949, %v851
    %v951 = vand.u32 2147483647, %v851
    %vm952 = vcmp.lt.f32.partialorder %v951, 0.0004427343
    %v953 = vsel %vm952, %v950, %v947
    %v954 = vadd.f32 %v853, 1.0
    %v955 = vlog2.pop %v954
    %v956 = vmul.f32 %v955, 0.6931472
    %v957 = vmul.f32 -0.5, %v853
    %v958 = vadd.f32 %v957, 1.0
    %v959 = vmul.f32 %v958, %v853
    %v960 = vand.u32 2147483647, %v853
    %vm961 = vcmp.lt.f32.partialorder %v960, 0.0004427343
    %v962 = vsel %vm961, %v959, %v956
    %v963 = vadd.f32 %v855, 1.0
    %v964 = vlog2.pop %v963
    %v965 = vmul.f32 %v964, 0.6931472
    %v966 = vmul.f32 -0.5, %v855
    %v967 = vadd.f32 %v966, 1.0
    %v968 = vmul.f32 %v967, %v855
    %v969 = vand.u32 2147483647, %v855
    %vm970 = vcmp.lt.f32.partialorder %v969, 0.0004427343
    %v971 = vsel %vm970, %v968, %v965
    %v972 = vadd.f32 %v857, 1.0
    %v973 = vlog2.pop %v972
    %v974 = vmul.f32 %v973, 0.6931472
    %v975 = vmul.f32 -0.5, %v857
    %v976 = vadd.f32 %v975, 1.0
    %v977 = vmul.f32 %v976, %v857
    %v978 = vand.u32 2147483647, %v857
    %vm979 = vcmp.lt.f32.partialorder %v978, 0.0004427343
    %v980 = vsel %vm979, %v977, %v974
    %v981 = vadd.f32 %v859, 1.0
    %v982 = vlog2.pop %v981
    %v983 = vmul.f32 %v982, 0.6931472
    %v984 = vmul.f32 -0.5, %v859
    %v985 = vadd.f32 %v984, 1.0
    %v986 = vmul.f32 %v985, %v859
    %v987 = vand.u32 2147483647, %v859
    %vm988 = vcmp.lt.f32.partialorder %v987, 0.0004427343
    %v989 = vsel %vm988, %v986, %v983
    %v990 = vadd.f32 %v861, 1.0
    %v991 = vlog2.pop %v990
    %v992 = vmul.f32 %v991, 0.6931472
    %v993 = vmul.f32 -0.5, %v861
    %v994 = vadd.f32 %v993, 1.0
    %v995 = vmul.f32 %v994, %v861
    %v996 = vand.u32 2147483647, %v861
    %vm997 = vcmp.lt.f32.partialorder %v996, 0.0004427343
    %v998 = vsel %vm997, %v995, %v992
    %v999 = vadd.f32 %v863, 1.0
    %v1000 = vlog2.pop %v999
    %v1001 = vmul.f32 %v1000, 0.6931472
    %v1002 = vmul.f32 -0.5, %v863
    %v1003 = vadd.f32 %v1002, 1.0
    %v1004 = vmul.f32 %v1003, %v863
    %v1005 = vand.u32 2147483647, %v863
    %vm1006 = vcmp.lt.f32.partialorder %v1005, 0.0004427343
    %v1007 = vsel %vm1006, %v1004, %v1001
    %v1008 = vsub.f32 %v784, %v872
    %v1009 = vsub.f32 %v785, %v881
    %v1010 = vsub.f32 %v786, %v890
    %v1011 = vsub.f32 %v787, %v899
    %v1012 = vsub.f32 %v788, %v908
    %v1013 = vsub.f32 %v789, %v917
    %v1014 = vsub.f32 %v790, %v926
    %v1015 = vsub.f32 %v791, %v935
    %v1016 = vsub.f32 %v792, %v944
    %v1017 = vsub.f32 %v793, %v953
    %v1018 = vsub.f32 %v794, %v962
    %v1019 = vsub.f32 %v795, %v971
    %v1020 = vsub.f32 %v796, %v980
    %v1021 = vsub.f32 %v797, %v989
    %v1022 = vsub.f32 %v798, %v998
    %v1023 = vsub.f32 %v799, %v1007
    %v1024 = vadd.f32 %v608, %v1008
    %v1025 = vadd.f32 %v609, %v1009
    %v1026 = vadd.f32 %v610, %v1010
    %v1027 = vadd.f32 %v611, %v1011
    %v1028 = vadd.f32 %v612, %v1012
    %v1029 = vadd.f32 %v613, %v1013
    %v1030 = vadd.f32 %v614, %v1014
    %v1031 = vadd.f32 %v615, %v1015
    %v1032 = vadd.f32 %v616, %v1016
    %v1033 = vadd.f32 %v617, %v1017
    %v1034 = vadd.f32 %v618, %v1018
    %v1035 = vadd.f32 %v619, %v1019
    %v1036 = vadd.f32 %v620, %v1020
    %v1037 = vadd.f32 %v621, %v1021
    %v1038 = vadd.f32 %v622, %v1022
    %v1039 = vadd.f32 %v623, %v1023
    %1040 = vset.pattern.permute.xlu0 1
    %1041 = vperm.xlu0 %1040, %v624
    %v1042 = vpop.permute.xlu0 %1041
    %1043 = vset.pattern.permute.xlu0 1
    %1044 = vperm.xlu0 %1043, %v625
    %v1045 = vpop.permute.xlu0 %1044
    %1046 = vset.pattern.permute.xlu0 1
    %1047 = vperm.xlu0 %1046, %v626
    %v1048 = vpop.permute.xlu0 %1047
    %1049 = vset.pattern.permute.xlu0 1
    %1050 = vperm.xlu0 %1049, %v627
    %v1051 = vpop.permute.xlu0 %1050
    %1052 = vset.pattern.permute.xlu0 1
    %1053 = vperm.xlu0 %1052, %v628
    %v1054 = vpop.permute.xlu0 %1053
    %1055 = vset.pattern.permute.xlu0 1
    %1056 = vperm.xlu0 %1055, %v629
    %v1057 = vpop.permute.xlu0 %1056
    %1058 = vset.pattern.permute.xlu0 1
    %1059 = vperm.xlu0 %1058, %v630
    %v1060 = vpop.permute.xlu0 %1059
    %1061 = vset.pattern.permute.xlu0 1
    %1062 = vperm.xlu0 %1061, %v631
    %v1063 = vpop.permute.xlu0 %1062
    %1064 = vset.pattern.permute.xlu0 1
    %1065 = vperm.xlu0 %1064, %v632
    %v1066 = vpop.permute.xlu0 %1065
    %1067 = vset.pattern.permute.xlu0 1
    %1068 = vperm.xlu0 %1067, %v633
    %v1069 = vpop.permute.xlu0 %1068
    %1070 = vset.pattern.permute.xlu0 1
    %1071 = vperm.xlu0 %1070, %v634
    %v1072 = vpop.permute.xlu0 %1071
    %1073 = vset.pattern.permute.xlu0 1
    %1074 = vperm.xlu0 %1073, %v635
    %v1075 = vpop.permute.xlu0 %1074
    %1076 = vset.pattern.permute.xlu0 1
    %1077 = vperm.xlu0 %1076, %v636
    %v1078 = vpop.permute.xlu0 %1077
    %1079 = vset.pattern.permute.xlu0 1
    %1080 = vperm.xlu0 %1079, %v637
    %v1081 = vpop.permute.xlu0 %1080
    %1082 = vset.pattern.permute.xlu0 1
    %1083 = vperm.xlu0 %1082, %v638
    %v1084 = vpop.permute.xlu0 %1083
    %1085 = vset.pattern.permute.xlu0 1
    %1086 = vperm.xlu0 %1085, %v639
    %v1087 = vpop.permute.xlu0 %1086
    %vm1088 = vcmp.eq.s32.totalorder %v239, %v1042
    %vm1089 = vcmp.eq.s32.totalorder %v239, %v1045
    %vm1090 = vcmp.eq.s32.totalorder %v239, %v1048
    %vm1091 = vcmp.eq.s32.totalorder %v239, %v1051
    %vm1092 = vcmp.eq.s32.totalorder %v239, %v1054
    %vm1093 = vcmp.eq.s32.totalorder %v239, %v1057
    %vm1094 = vcmp.eq.s32.totalorder %v239, %v1060
    %vm1095 = vcmp.eq.s32.totalorder %v239, %v1063
    %vm1096 = vcmp.eq.s32.totalorder %v239, %v1066
    %vm1097 = vcmp.eq.s32.totalorder %v239, %v1069
    %vm1098 = vcmp.eq.s32.totalorder %v239, %v1072
    %vm1099 = vcmp.eq.s32.totalorder %v239, %v1075
    %vm1100 = vcmp.eq.s32.totalorder %v239, %v1078
    %vm1101 = vcmp.eq.s32.totalorder %v239, %v1081
    %vm1102 = vcmp.eq.s32.totalorder %v239, %v1084
    %vm1103 = vcmp.eq.s32.totalorder %v239, %v1087
    %v1104 = vsel %vm1088, %v160, 0.0
    %v1105 = vsel %vm1089, %v165, 0.0
    %v1106 = vsel %vm1090, %v170, 0.0
    %v1107 = vsel %vm1091, %v175, 0.0
    %v1108 = vsel %vm1092, %v180, 0.0
    %v1109 = vsel %vm1093, %v185, 0.0
    %v1110 = vsel %vm1094, %v190, 0.0
    %v1111 = vsel %vm1095, %v195, 0.0
    %v1112 = vsel %vm1096, %v200, 0.0
    %v1113 = vsel %vm1097, %v205, 0.0
    %v1114 = vsel %vm1098, %v210, 0.0
    %v1115 = vsel %vm1099, %v215, 0.0
    %v1116 = vsel %vm1100, %v220, 0.0
    %v1117 = vsel %vm1101, %v225, 0.0
    %v1118 = vsel %vm1102, %v230, 0.0
    %v1119 = vsel %vm1103, %v235, 0.0
    %v1120 = vsel %vm44, %v1104, 0.0
    %1121 = vadd.xlane.f32.xlu0 %v1120
    %v1122 = vpop.xlane.xlu0 %1121
    %v1123 = vsel %vm44, %v1105, 0.0
    %1124 = vadd.xlane.f32.xlu0 %v1123
    %v1125 = vpop.xlane.xlu0 %1124
    %v1126 = vsel %vm44, %v1106, 0.0
    %1127 = vadd.xlane.f32.xlu0 %v1126
    %v1128 = vpop.xlane.xlu0 %1127
    %v1129 = vsel %vm44, %v1107, 0.0
    %1130 = vadd.xlane.f32.xlu0 %v1129
    %v1131 = vpop.xlane.xlu0 %1130
    %v1132 = vsel %vm44, %v1108, 0.0
    %1133 = vadd.xlane.f32.xlu0 %v1132
    %v1134 = vpop.xlane.xlu0 %1133
    %v1135 = vsel %vm44, %v1109, 0.0
    %1136 = vadd.xlane.f32.xlu0 %v1135
    %v1137 = vpop.xlane.xlu0 %1136
    %v1138 = vsel %vm44, %v1110, 0.0
    %1139 = vadd.xlane.f32.xlu0 %v1138
    %v1140 = vpop.xlane.xlu0 %1139
    %v1141 = vsel %vm44, %v1111, 0.0
    %1142 = vadd.xlane.f32.xlu0 %v1141
    %v1143 = vpop.xlane.xlu0 %1142
    %v1144 = vsel %vm44, %v1112, 0.0
    %1145 = vadd.xlane.f32.xlu0 %v1144
    %v1146 = vpop.xlane.xlu0 %1145
    %v1147 = vsel %vm44, %v1113, 0.0
    %1148 = vadd.xlane.f32.xlu0 %v1147
    %v1149 = vpop.xlane.xlu0 %1148
    %v1150 = vsel %vm44, %v1114, 0.0
    %1151 = vadd.xlane.f32.xlu0 %v1150
    %v1152 = vpop.xlane.xlu0 %1151
    %v1153 = vsel %vm44, %v1115, 0.0
    %1154 = vadd.xlane.f32.xlu0 %v1153
    %v1155 = vpop.xlane.xlu0 %1154
    %v1156 = vsel %vm44, %v1116, 0.0
    %1157 = vadd.xlane.f32.xlu0 %v1156
    %v1158 = vpop.xlane.xlu0 %1157
    %v1159 = vsel %vm44, %v1117, 0.0
    %1160 = vadd.xlane.f32.xlu0 %v1159
    %v1161 = vpop.xlane.xlu0 %1160
    %v1162 = vsel %vm44, %v1118, 0.0
    %1163 = vadd.xlane.f32.xlu0 %v1162
    %v1164 = vpop.xlane.xlu0 %1163
    %v1165 = vsel %vm44, %v1119, 0.0
    %1166 = vadd.xlane.f32.xlu0 %v1165
    %v1167 = vpop.xlane.xlu0 %1166
    %v1168 = vsub.f32 0.0, %v1122
    %v1169 = vsub.f32 0.0, %v1125
    %v1170 = vsub.f32 0.0, %v1128
    %v1171 = vsub.f32 0.0, %v1131
    %v1172 = vsub.f32 0.0, %v1134
    %v1173 = vsub.f32 0.0, %v1137
    %v1174 = vsub.f32 0.0, %v1140
    %v1175 = vsub.f32 0.0, %v1143
    %v1176 = vsub.f32 0.0, %v1146
    %v1177 = vsub.f32 0.0, %v1149
    %v1178 = vsub.f32 0.0, %v1152
    %v1179 = vsub.f32 0.0, %v1155
    %v1180 = vsub.f32 0.0, %v1158
    %v1181 = vsub.f32 0.0, %v1161
    %v1182 = vsub.f32 0.0, %v1164
    %v1183 = vsub.f32 0.0, %v1167
    %v1184 = vmin.f32 %v1168, 0.0
    %v1185 = vmin.f32 %v1169, 0.0
    %v1186 = vmin.f32 %v1170, 0.0
    %v1187 = vmin.f32 %v1171, 0.0
    %v1188 = vmin.f32 %v1172, 0.0
    %v1189 = vmin.f32 %v1173, 0.0
    %v1190 = vmin.f32 %v1174, 0.0
    %v1191 = vmin.f32 %v1175, 0.0
    %v1192 = vmin.f32 %v1176, 0.0
    %v1193 = vmin.f32 %v1177, 0.0
    %v1194 = vmin.f32 %v1178, 0.0
    %v1195 = vmin.f32 %v1179, 0.0
    %v1196 = vmin.f32 %v1180, 0.0
    %v1197 = vmin.f32 %v1181, 0.0
    %v1198 = vmin.f32 %v1182, 0.0
    %v1199 = vmin.f32 %v1183, 0.0
    %v1200 = vand.u32 2147483647, %v1168
    %v1201 = vand.u32 2147483647, %v1169
    %v1202 = vand.u32 2147483647, %v1170
    %v1203 = vand.u32 2147483647, %v1171
    %v1204 = vand.u32 2147483647, %v1172
    %v1205 = vand.u32 2147483647, %v1173
    %v1206 = vand.u32 2147483647, %v1174
    %v1207 = vand.u32 2147483647, %v1175
    %v1208 = vand.u32 2147483647, %v1176
    %v1209 = vand.u32 2147483647, %v1177
    %v1210 = vand.u32 2147483647, %v1178
    %v1211 = vand.u32 2147483647, %v1179
    %v1212 = vand.u32 2147483647, %v1180
    %v1213 = vand.u32 2147483647, %v1181
    %v1214 = vand.u32 2147483647, %v1182
    %v1215 = vand.u32 2147483647, %v1183
    %v1216 = vsub.f32 0.0, %v1200
    %v1217 = vsub.f32 0.0, %v1201
    %v1218 = vsub.f32 0.0, %v1202
    %v1219 = vsub.f32 0.0, %v1203
    %v1220 = vsub.f32 0.0, %v1204
    %v1221 = vsub.f32 0.0, %v1205
    %v1222 = vsub.f32 0.0, %v1206
    %v1223 = vsub.f32 0.0, %v1207
    %v1224 = vsub.f32 0.0, %v1208
    %v1225 = vsub.f32 0.0, %v1209
    %v1226 = vsub.f32 0.0, %v1210
    %v1227 = vsub.f32 0.0, %v1211
    %v1228 = vsub.f32 0.0, %v1212
    %v1229 = vsub.f32 0.0, %v1213
    %v1230 = vsub.f32 0.0, %v1214
    %v1231 = vsub.f32 0.0, %v1215
    %v1232 = vmul.f32 %v1216, 1.442695
    %v1233 = vpow.pop %v1232
    %v1234 = vmul.f32 %v1217, 1.442695
    %v1235 = vpow.pop %v1234
    %v1236 = vmul.f32 %v1218, 1.442695
    %v1237 = vpow.pop %v1236
    %v1238 = vmul.f32 %v1219, 1.442695
    %v1239 = vpow.pop %v1238
    %v1240 = vmul.f32 %v1220, 1.442695
    %v1241 = vpow.pop %v1240
    %v1242 = vmul.f32 %v1221, 1.442695
    %v1243 = vpow.pop %v1242
    %v1244 = vmul.f32 %v1222, 1.442695
    %v1245 = vpow.pop %v1244
    %v1246 = vmul.f32 %v1223, 1.442695
    %v1247 = vpow.pop %v1246
    %v1248 = vmul.f32 %v1224, 1.442695
    %v1249 = vpow.pop %v1248
    %v1250 = vmul.f32 %v1225, 1.442695
    %v1251 = vpow.pop %v1250
    %v1252 = vmul.f32 %v1226, 1.442695
    %v1253 = vpow.pop %v1252
    %v1254 = vmul.f32 %v1227, 1.442695
    %v1255 = vpow.pop %v1254
    %v1256 = vmul.f32 %v1228, 1.442695
    %v1257 = vpow.pop %v1256
    %v1258 = vmul.f32 %v1229, 1.442695
    %v1259 = vpow.pop %v1258
    %v1260 = vmul.f32 %v1230, 1.442695
    %v1261 = vpow.pop %v1260
    %v1262 = vmul.f32 %v1231, 1.442695
    %v1263 = vpow.pop %v1262
    %v1264 = vadd.f32 %v1233, 1.0
    %v1265 = vlog2.pop %v1264
    %v1266 = vmul.f32 %v1265, 0.6931472
    %v1267 = vmul.f32 -0.5, %v1233
    %v1268 = vadd.f32 %v1267, 1.0
    %v1269 = vmul.f32 %v1268, %v1233
    %v1270 = vand.u32 2147483647, %v1233
    %vm1271 = vcmp.lt.f32.partialorder %v1270, 0.0004427343
    %v1272 = vsel %vm1271, %v1269, %v1266
    %v1273 = vadd.f32 %v1235, 1.0
    %v1274 = vlog2.pop %v1273
    %v1275 = vmul.f32 %v1274, 0.6931472
    %v1276 = vmul.f32 -0.5, %v1235
    %v1277 = vadd.f32 %v1276, 1.0
    %v1278 = vmul.f32 %v1277, %v1235
    %v1279 = vand.u32 2147483647, %v1235
    %vm1280 = vcmp.lt.f32.partialorder %v1279, 0.0004427343
    %v1281 = vsel %vm1280, %v1278, %v1275
    %v1282 = vadd.f32 %v1237, 1.0
    %v1283 = vlog2.pop %v1282
    %v1284 = vmul.f32 %v1283, 0.6931472
    %v1285 = vmul.f32 -0.5, %v1237
    %v1286 = vadd.f32 %v1285, 1.0
    %v1287 = vmul.f32 %v1286, %v1237
    %v1288 = vand.u32 2147483647, %v1237
    %vm1289 = vcmp.lt.f32.partialorder %v1288, 0.0004427343
    %v1290 = vsel %vm1289, %v1287, %v1284
    %v1291 = vadd.f32 %v1239, 1.0
    %v1292 = vlog2.pop %v1291
    %v1293 = vmul.f32 %v1292, 0.6931472
    %v1294 = vmul.f32 -0.5, %v1239
    %v1295 = vadd.f32 %v1294, 1.0
    %v1296 = vmul.f32 %v1295, %v1239
    %v1297 = vand.u32 2147483647, %v1239
    %vm1298 = vcmp.lt.f32.partialorder %v1297, 0.0004427343
    %v1299 = vsel %vm1298, %v1296, %v1293
    %v1300 = vadd.f32 %v1241, 1.0
    %v1301 = vlog2.pop %v1300
    %v1302 = vmul.f32 %v1301, 0.6931472
    %v1303 = vmul.f32 -0.5, %v1241
    %v1304 = vadd.f32 %v1303, 1.0
    %v1305 = vmul.f32 %v1304, %v1241
    %v1306 = vand.u32 2147483647, %v1241
    %vm1307 = vcmp.lt.f32.partialorder %v1306, 0.0004427343
    %v1308 = vsel %vm1307, %v1305, %v1302
    %v1309 = vadd.f32 %v1243, 1.0
    %v1310 = vlog2.pop %v1309
    %v1311 = vmul.f32 %v1310, 0.6931472
    %v1312 = vmul.f32 -0.5, %v1243
    %v1313 = vadd.f32 %v1312, 1.0
    %v1314 = vmul.f32 %v1313, %v1243
    %v1315 = vand.u32 2147483647, %v1243
    %vm1316 = vcmp.lt.f32.partialorder %v1315, 0.0004427343
    %v1317 = vsel %vm1316, %v1314, %v1311
    %v1318 = vadd.f32 %v1245, 1.0
    %v1319 = vlog2.pop %v1318
    %v1320 = vmul.f32 %v1319, 0.6931472
    %v1321 = vmul.f32 -0.5, %v1245
    %v1322 = vadd.f32 %v1321, 1.0
    %v1323 = vmul.f32 %v1322, %v1245
    %v1324 = vand.u32 2147483647, %v1245
    %vm1325 = vcmp.lt.f32.partialorder %v1324, 0.0004427343
    %v1326 = vsel %vm1325, %v1323, %v1320
    %v1327 = vadd.f32 %v1247, 1.0
    %v1328 = vlog2.pop %v1327
    %v1329 = vmul.f32 %v1328, 0.6931472
    %v1330 = vmul.f32 -0.5, %v1247
    %v1331 = vadd.f32 %v1330, 1.0
    %v1332 = vmul.f32 %v1331, %v1247
    %v1333 = vand.u32 2147483647, %v1247
    %vm1334 = vcmp.lt.f32.partialorder %v1333, 0.0004427343
    %v1335 = vsel %vm1334, %v1332, %v1329
    %v1336 = vadd.f32 %v1249, 1.0
    %v1337 = vlog2.pop %v1336
    %v1338 = vmul.f32 %v1337, 0.6931472
    %v1339 = vmul.f32 -0.5, %v1249
    %v1340 = vadd.f32 %v1339, 1.0
    %v1341 = vmul.f32 %v1340, %v1249
    %v1342 = vand.u32 2147483647, %v1249
    %vm1343 = vcmp.lt.f32.partialorder %v1342, 0.0004427343
    %v1344 = vsel %vm1343, %v1341, %v1338
    %v1345 = vadd.f32 %v1251, 1.0
    %v1346 = vlog2.pop %v1345
    %v1347 = vmul.f32 %v1346, 0.6931472
    %v1348 = vmul.f32 -0.5, %v1251
    %v1349 = vadd.f32 %v1348, 1.0
    %v1350 = vmul.f32 %v1349, %v1251
    %v1351 = vand.u32 2147483647, %v1251
    %vm1352 = vcmp.lt.f32.partialorder %v1351, 0.0004427343
    %v1353 = vsel %vm1352, %v1350, %v1347
    %v1354 = vadd.f32 %v1253, 1.0
    %v1355 = vlog2.pop %v1354
    %v1356 = vmul.f32 %v1355, 0.6931472
    %v1357 = vmul.f32 -0.5, %v1253
    %v1358 = vadd.f32 %v1357, 1.0
    %v1359 = vmul.f32 %v1358, %v1253
    %v1360 = vand.u32 2147483647, %v1253
    %vm1361 = vcmp.lt.f32.partialorder %v1360, 0.0004427343
    %v1362 = vsel %vm1361, %v1359, %v1356
    %v1363 = vadd.f32 %v1255, 1.0
    %v1364 = vlog2.pop %v1363
    %v1365 = vmul.f32 %v1364, 0.6931472
    %v1366 = vmul.f32 -0.5, %v1255
    %v1367 = vadd.f32 %v1366, 1.0
    %v1368 = vmul.f32 %v1367, %v1255
    %v1369 = vand.u32 2147483647, %v1255
    %vm1370 = vcmp.lt.f32.partialorder %v1369, 0.0004427343
    %v1371 = vsel %vm1370, %v1368, %v1365
    %v1372 = vadd.f32 %v1257, 1.0
    %v1373 = vlog2.pop %v1372
    %v1374 = vmul.f32 %v1373, 0.6931472
    %v1375 = vmul.f32 -0.5, %v1257
    %v1376 = vadd.f32 %v1375, 1.0
    %v1377 = vmul.f32 %v1376, %v1257
    %v1378 = vand.u32 2147483647, %v1257
    %vm1379 = vcmp.lt.f32.partialorder %v1378, 0.0004427343
    %v1380 = vsel %vm1379, %v1377, %v1374
    %v1381 = vadd.f32 %v1259, 1.0
    %v1382 = vlog2.pop %v1381
    %v1383 = vmul.f32 %v1382, 0.6931472
    %v1384 = vmul.f32 -0.5, %v1259
    %v1385 = vadd.f32 %v1384, 1.0
    %v1386 = vmul.f32 %v1385, %v1259
    %v1387 = vand.u32 2147483647, %v1259
    %vm1388 = vcmp.lt.f32.partialorder %v1387, 0.0004427343
    %v1389 = vsel %vm1388, %v1386, %v1383
    %v1390 = vadd.f32 %v1261, 1.0
    %v1391 = vlog2.pop %v1390
    %v1392 = vmul.f32 %v1391, 0.6931472
    %v1393 = vmul.f32 -0.5, %v1261
    %v1394 = vadd.f32 %v1393, 1.0
    %v1395 = vmul.f32 %v1394, %v1261
    %v1396 = vand.u32 2147483647, %v1261
    %vm1397 = vcmp.lt.f32.partialorder %v1396, 0.0004427343
    %v1398 = vsel %vm1397, %v1395, %v1392
    %v1399 = vadd.f32 %v1263, 1.0
    %v1400 = vlog2.pop %v1399
    %v1401 = vmul.f32 %v1400, 0.6931472
    %v1402 = vmul.f32 -0.5, %v1263
    %v1403 = vadd.f32 %v1402, 1.0
    %v1404 = vmul.f32 %v1403, %v1263
    %v1405 = vand.u32 2147483647, %v1263
    %vm1406 = vcmp.lt.f32.partialorder %v1405, 0.0004427343
    %v1407 = vsel %vm1406, %v1404, %v1401
    %v1408 = vsub.f32 %v1184, %v1272
    %v1409 = vsub.f32 %v1185, %v1281
    %v1410 = vsub.f32 %v1186, %v1290
    %v1411 = vsub.f32 %v1187, %v1299
    %v1412 = vsub.f32 %v1188, %v1308
    %v1413 = vsub.f32 %v1189, %v1317
    %v1414 = vsub.f32 %v1190, %v1326
    %v1415 = vsub.f32 %v1191, %v1335
    %v1416 = vsub.f32 %v1192, %v1344
    %v1417 = vsub.f32 %v1193, %v1353
    %v1418 = vsub.f32 %v1194, %v1362
    %v1419 = vsub.f32 %v1195, %v1371
    %v1420 = vsub.f32 %v1196, %v1380
    %v1421 = vsub.f32 %v1197, %v1389
    %v1422 = vsub.f32 %v1198, %v1398
    %v1423 = vsub.f32 %v1199, %v1407
    %v1424 = vadd.f32 %v1024, %v1408
    %v1425 = vadd.f32 %v1025, %v1409
    %v1426 = vadd.f32 %v1026, %v1410
    %v1427 = vadd.f32 %v1027, %v1411
    %v1428 = vadd.f32 %v1028, %v1412
    %v1429 = vadd.f32 %v1029, %v1413
    %v1430 = vadd.f32 %v1030, %v1414
    %v1431 = vadd.f32 %v1031, %v1415
    %v1432 = vadd.f32 %v1032, %v1416
    %v1433 = vadd.f32 %v1033, %v1417
    %v1434 = vadd.f32 %v1034, %v1418
    %v1435 = vadd.f32 %v1035, %v1419
    %v1436 = vadd.f32 %v1036, %v1420
    %v1437 = vadd.f32 %v1037, %v1421
    %v1438 = vadd.f32 %v1038, %v1422
    %v1439 = vadd.f32 %v1039, %v1423
    %1440 = vset.pattern.permute.xlu0 2
    %1441 = vperm.xlu0 %1440, %v624
    %v1442 = vpop.permute.xlu0 %1441
    %1443 = vset.pattern.permute.xlu0 2
    %1444 = vperm.xlu0 %1443, %v625
    %v1445 = vpop.permute.xlu0 %1444
    %1446 = vset.pattern.permute.xlu0 2
    %1447 = vperm.xlu0 %1446, %v626
    %v1448 = vpop.permute.xlu0 %1447
    %1449 = vset.pattern.permute.xlu0 2
    %1450 = vperm.xlu0 %1449, %v627
    %v1451 = vpop.permute.xlu0 %1450
    %1452 = vset.pattern.permute.xlu0 2
    %1453 = vperm.xlu0 %1452, %v628
    %v1454 = vpop.permute.xlu0 %1453
    %1455 = vset.pattern.permute.xlu0 2
    %1456 = vperm.xlu0 %1455, %v629
    %v1457 = vpop.permute.xlu0 %1456
    %1458 = vset.pattern.permute.xlu0 2
    %1459 = vperm.xlu0 %1458, %v630
    %v1460 = vpop.permute.xlu0 %1459
    %1461 = vset.pattern.permute.xlu0 2
    %1462 = vperm.xlu0 %1461, %v631
    %v1463 = vpop.permute.xlu0 %1462
    %1464 = vset.pattern.permute.xlu0 2
    %1465 = vperm.xlu0 %1464, %v632
    %v1466 = vpop.permute.xlu0 %1465
    %1467 = vset.pattern.permute.xlu0 2
    %1468 = vperm.xlu0 %1467, %v633
    %v1469 = vpop.permute.xlu0 %1468
    %1470 = vset.pattern.permute.xlu0 2
    %1471 = vperm.xlu0 %1470, %v634
    %v1472 = vpop.permute.xlu0 %1471
    %1473 = vset.pattern.permute.xlu0 2
    %1474 = vperm.xlu0 %1473, %v635
    %v1475 = vpop.permute.xlu0 %1474
    %1476 = vset.pattern.permute.xlu0 2
    %1477 = vperm.xlu0 %1476, %v636
    %v1478 = vpop.permute.xlu0 %1477
    %1479 = vset.pattern.permute.xlu0 2
    %1480 = vperm.xlu0 %1479, %v637
    %v1481 = vpop.permute.xlu0 %1480
    %1482 = vset.pattern.permute.xlu0 2
    %1483 = vperm.xlu0 %1482, %v638
    %v1484 = vpop.permute.xlu0 %1483
    %1485 = vset.pattern.permute.xlu0 2
    %1486 = vperm.xlu0 %1485, %v639
    %v1487 = vpop.permute.xlu0 %1486
    %vm1488 = vcmp.eq.s32.totalorder %v239, %v1442
    %vm1489 = vcmp.eq.s32.totalorder %v239, %v1445
    %vm1490 = vcmp.eq.s32.totalorder %v239, %v1448
    %vm1491 = vcmp.eq.s32.totalorder %v239, %v1451
    %vm1492 = vcmp.eq.s32.totalorder %v239, %v1454
    %vm1493 = vcmp.eq.s32.totalorder %v239, %v1457
    %vm1494 = vcmp.eq.s32.totalorder %v239, %v1460
    %vm1495 = vcmp.eq.s32.totalorder %v239, %v1463
    %vm1496 = vcmp.eq.s32.totalorder %v239, %v1466
    %vm1497 = vcmp.eq.s32.totalorder %v239, %v1469
    %vm1498 = vcmp.eq.s32.totalorder %v239, %v1472
    %vm1499 = vcmp.eq.s32.totalorder %v239, %v1475
    %vm1500 = vcmp.eq.s32.totalorder %v239, %v1478
    %vm1501 = vcmp.eq.s32.totalorder %v239, %v1481
    %vm1502 = vcmp.eq.s32.totalorder %v239, %v1484
    %vm1503 = vcmp.eq.s32.totalorder %v239, %v1487
    %v1504 = vsel %vm1488, %v160, 0.0
    %v1505 = vsel %vm1489, %v165, 0.0
    %v1506 = vsel %vm1490, %v170, 0.0
    %v1507 = vsel %vm1491, %v175, 0.0
    %v1508 = vsel %vm1492, %v180, 0.0
    %v1509 = vsel %vm1493, %v185, 0.0
    %v1510 = vsel %vm1494, %v190, 0.0
    %v1511 = vsel %vm1495, %v195, 0.0
    %v1512 = vsel %vm1496, %v200, 0.0
    %v1513 = vsel %vm1497, %v205, 0.0
    %v1514 = vsel %vm1498, %v210, 0.0
    %v1515 = vsel %vm1499, %v215, 0.0
    %v1516 = vsel %vm1500, %v220, 0.0
    %v1517 = vsel %vm1501, %v225, 0.0
    %v1518 = vsel %vm1502, %v230, 0.0
    %v1519 = vsel %vm1503, %v235, 0.0
    %v1520 = vsel %vm44, %v1504, 0.0
    %1521 = vadd.xlane.f32.xlu0 %v1520
    %v1522 = vpop.xlane.xlu0 %1521
    %v1523 = vsel %vm44, %v1505, 0.0
    %1524 = vadd.xlane.f32.xlu0 %v1523
    %v1525 = vpop.xlane.xlu0 %1524
    %v1526 = vsel %vm44, %v1506, 0.0
    %1527 = vadd.xlane.f32.xlu0 %v1526
    %v1528 = vpop.xlane.xlu0 %1527
    %v1529 = vsel %vm44, %v1507, 0.0
    %1530 = vadd.xlane.f32.xlu0 %v1529
    %v1531 = vpop.xlane.xlu0 %1530
    %v1532 = vsel %vm44, %v1508, 0.0
    %1533 = vadd.xlane.f32.xlu0 %v1532
    %v1534 = vpop.xlane.xlu0 %1533
    %v1535 = vsel %vm44, %v1509, 0.0
    %1536 = vadd.xlane.f32.xlu0 %v1535
    %v1537 = vpop.xlane.xlu0 %1536
    %v1538 = vsel %vm44, %v1510, 0.0
    %1539 = vadd.xlane.f32.xlu0 %v1538
    %v1540 = vpop.xlane.xlu0 %1539
    %v1541 = vsel %vm44, %v1511, 0.0
    %1542 = vadd.xlane.f32.xlu0 %v1541
    %v1543 = vpop.xlane.xlu0 %1542
    %v1544 = vsel %vm44, %v1512, 0.0
    %1545 = vadd.xlane.f32.xlu0 %v1544
    %v1546 = vpop.xlane.xlu0 %1545
    %v1547 = vsel %vm44, %v1513, 0.0
    %1548 = vadd.xlane.f32.xlu0 %v1547
    %v1549 = vpop.xlane.xlu0 %1548
    %v1550 = vsel %vm44, %v1514, 0.0
    %1551 = vadd.xlane.f32.xlu0 %v1550
    %v1552 = vpop.xlane.xlu0 %1551
    %v1553 = vsel %vm44, %v1515, 0.0
    %1554 = vadd.xlane.f32.xlu0 %v1553
    %v1555 = vpop.xlane.xlu0 %1554
    %v1556 = vsel %vm44, %v1516, 0.0
    %1557 = vadd.xlane.f32.xlu0 %v1556
    %v1558 = vpop.xlane.xlu0 %1557
    %v1559 = vsel %vm44, %v1517, 0.0
    %1560 = vadd.xlane.f32.xlu0 %v1559
    %v1561 = vpop.xlane.xlu0 %1560
    %v1562 = vsel %vm44, %v1518, 0.0
    %1563 = vadd.xlane.f32.xlu0 %v1562
    %v1564 = vpop.xlane.xlu0 %1563
    %v1565 = vsel %vm44, %v1519, 0.0
    %1566 = vadd.xlane.f32.xlu0 %v1565
    %v1567 = vpop.xlane.xlu0 %1566
    %v1568 = vsub.f32 0.0, %v1522
    %v1569 = vsub.f32 0.0, %v1525
    %v1570 = vsub.f32 0.0, %v1528
    %v1571 = vsub.f32 0.0, %v1531
    %v1572 = vsub.f32 0.0, %v1534
    %v1573 = vsub.f32 0.0, %v1537
    %v1574 = vsub.f32 0.0, %v1540
    %v1575 = vsub.f32 0.0, %v1543
    %v1576 = vsub.f32 0.0, %v1546
    %v1577 = vsub.f32 0.0, %v1549
    %v1578 = vsub.f32 0.0, %v1552
    %v1579 = vsub.f32 0.0, %v1555
    %v1580 = vsub.f32 0.0, %v1558
    %v1581 = vsub.f32 0.0, %v1561
    %v1582 = vsub.f32 0.0, %v1564
    %v1583 = vsub.f32 0.0, %v1567
    %v1584 = vmin.f32 %v1568, 0.0
    %v1585 = vmin.f32 %v1569, 0.0
    %v1586 = vmin.f32 %v1570, 0.0
    %v1587 = vmin.f32 %v1571, 0.0
    %v1588 = vmin.f32 %v1572, 0.0
    %v1589 = vmin.f32 %v1573, 0.0
    %v1590 = vmin.f32 %v1574, 0.0
    %v1591 = vmin.f32 %v1575, 0.0
    %v1592 = vmin.f32 %v1576, 0.0
    %v1593 = vmin.f32 %v1577, 0.0
    %v1594 = vmin.f32 %v1578, 0.0
    %v1595 = vmin.f32 %v1579, 0.0
    %v1596 = vmin.f32 %v1580, 0.0
    %v1597 = vmin.f32 %v1581, 0.0
    %v1598 = vmin.f32 %v1582, 0.0
    %v1599 = vmin.f32 %v1583, 0.0
    %v1600 = vand.u32 2147483647, %v1568
    %v1601 = vand.u32 2147483647, %v1569
    %v1602 = vand.u32 2147483647, %v1570
    %v1603 = vand.u32 2147483647, %v1571
    %v1604 = vand.u32 2147483647, %v1572
    %v1605 = vand.u32 2147483647, %v1573
    %v1606 = vand.u32 2147483647, %v1574
    %v1607 = vand.u32 2147483647, %v1575
    %v1608 = vand.u32 2147483647, %v1576
    %v1609 = vand.u32 2147483647, %v1577
    %v1610 = vand.u32 2147483647, %v1578
    %v1611 = vand.u32 2147483647, %v1579
    %v1612 = vand.u32 2147483647, %v1580
    %v1613 = vand.u32 2147483647, %v1581
    %v1614 = vand.u32 2147483647, %v1582
    %v1615 = vand.u32 2147483647, %v1583
    %v1616 = vsub.f32 0.0, %v1600
    %v1617 = vsub.f32 0.0, %v1601
    %v1618 = vsub.f32 0.0, %v1602
    %v1619 = vsub.f32 0.0, %v1603
    %v1620 = vsub.f32 0.0, %v1604
    %v1621 = vsub.f32 0.0, %v1605
    %v1622 = vsub.f32 0.0, %v1606
    %v1623 = vsub.f32 0.0, %v1607
    %v1624 = vsub.f32 0.0, %v1608
    %v1625 = vsub.f32 0.0, %v1609
    %v1626 = vsub.f32 0.0, %v1610
    %v1627 = vsub.f32 0.0, %v1611
    %v1628 = vsub.f32 0.0, %v1612
    %v1629 = vsub.f32 0.0, %v1613
    %v1630 = vsub.f32 0.0, %v1614
    %v1631 = vsub.f32 0.0, %v1615
    %v1632 = vmul.f32 %v1616, 1.442695
    %v1633 = vpow.pop %v1632
    %v1634 = vmul.f32 %v1617, 1.442695
    %v1635 = vpow.pop %v1634
    %v1636 = vmul.f32 %v1618, 1.442695
    %v1637 = vpow.pop %v1636
    %v1638 = vmul.f32 %v1619, 1.442695
    %v1639 = vpow.pop %v1638
    %v1640 = vmul.f32 %v1620, 1.442695
    %v1641 = vpow.pop %v1640
    %v1642 = vmul.f32 %v1621, 1.442695
    %v1643 = vpow.pop %v1642
    %v1644 = vmul.f32 %v1622, 1.442695
    %v1645 = vpow.pop %v1644
    %v1646 = vmul.f32 %v1623, 1.442695
    %v1647 = vpow.pop %v1646
    %v1648 = vmul.f32 %v1624, 1.442695
    %v1649 = vpow.pop %v1648
    %v1650 = vmul.f32 %v1625, 1.442695
    %v1651 = vpow.pop %v1650
    %v1652 = vmul.f32 %v1626, 1.442695
    %v1653 = vpow.pop %v1652
    %v1654 = vmul.f32 %v1627, 1.442695
    %v1655 = vpow.pop %v1654
    %v1656 = vmul.f32 %v1628, 1.442695
    %v1657 = vpow.pop %v1656
    %v1658 = vmul.f32 %v1629, 1.442695
    %v1659 = vpow.pop %v1658
    %v1660 = vmul.f32 %v1630, 1.442695
    %v1661 = vpow.pop %v1660
    %v1662 = vmul.f32 %v1631, 1.442695
    %v1663 = vpow.pop %v1662
    %v1664 = vadd.f32 %v1633, 1.0
    %v1665 = vlog2.pop %v1664
    %v1666 = vmul.f32 %v1665, 0.6931472
    %v1667 = vmul.f32 -0.5, %v1633
    %v1668 = vadd.f32 %v1667, 1.0
    %v1669 = vmul.f32 %v1668, %v1633
    %v1670 = vand.u32 2147483647, %v1633
    %vm1671 = vcmp.lt.f32.partialorder %v1670, 0.0004427343
    %v1672 = vsel %vm1671, %v1669, %v1666
    %v1673 = vadd.f32 %v1635, 1.0
    %v1674 = vlog2.pop %v1673
    %v1675 = vmul.f32 %v1674, 0.6931472
    %v1676 = vmul.f32 -0.5, %v1635
    %v1677 = vadd.f32 %v1676, 1.0
    %v1678 = vmul.f32 %v1677, %v1635
    %v1679 = vand.u32 2147483647, %v1635
    %vm1680 = vcmp.lt.f32.partialorder %v1679, 0.0004427343
    %v1681 = vsel %vm1680, %v1678, %v1675
    %v1682 = vadd.f32 %v1637, 1.0
    %v1683 = vlog2.pop %v1682
    %v1684 = vmul.f32 %v1683, 0.6931472
    %v1685 = vmul.f32 -0.5, %v1637
    %v1686 = vadd.f32 %v1685, 1.0
    %v1687 = vmul.f32 %v1686, %v1637
    %v1688 = vand.u32 2147483647, %v1637
    %vm1689 = vcmp.lt.f32.partialorder %v1688, 0.0004427343
    %v1690 = vsel %vm1689, %v1687, %v1684
    %v1691 = vadd.f32 %v1639, 1.0
    %v1692 = vlog2.pop %v1691
    %v1693 = vmul.f32 %v1692, 0.6931472
    %v1694 = vmul.f32 -0.5, %v1639
    %v1695 = vadd.f32 %v1694, 1.0
    %v1696 = vmul.f32 %v1695, %v1639
    %v1697 = vand.u32 2147483647, %v1639
    %vm1698 = vcmp.lt.f32.partialorder %v1697, 0.0004427343
    %v1699 = vsel %vm1698, %v1696, %v1693
    %v1700 = vadd.f32 %v1641, 1.0
    %v1701 = vlog2.pop %v1700
    %v1702 = vmul.f32 %v1701, 0.6931472
    %v1703 = vmul.f32 -0.5, %v1641
    %v1704 = vadd.f32 %v1703, 1.0
    %v1705 = vmul.f32 %v1704, %v1641
    %v1706 = vand.u32 2147483647, %v1641
    %vm1707 = vcmp.lt.f32.partialorder %v1706, 0.0004427343
    %v1708 = vsel %vm1707, %v1705, %v1702
    %v1709 = vadd.f32 %v1643, 1.0
    %v1710 = vlog2.pop %v1709
    %v1711 = vmul.f32 %v1710, 0.6931472
    %v1712 = vmul.f32 -0.5, %v1643
    %v1713 = vadd.f32 %v1712, 1.0
    %v1714 = vmul.f32 %v1713, %v1643
    %v1715 = vand.u32 2147483647, %v1643
    %vm1716 = vcmp.lt.f32.partialorder %v1715, 0.0004427343
    %v1717 = vsel %vm1716, %v1714, %v1711
    %v1718 = vadd.f32 %v1645, 1.0
    %v1719 = vlog2.pop %v1718
    %v1720 = vmul.f32 %v1719, 0.6931472
    %v1721 = vmul.f32 -0.5, %v1645
    %v1722 = vadd.f32 %v1721, 1.0
    %v1723 = vmul.f32 %v1722, %v1645
    %v1724 = vand.u32 2147483647, %v1645
    %vm1725 = vcmp.lt.f32.partialorder %v1724, 0.0004427343
    %v1726 = vsel %vm1725, %v1723, %v1720
    %v1727 = vadd.f32 %v1647, 1.0
    %v1728 = vlog2.pop %v1727
    %v1729 = vmul.f32 %v1728, 0.6931472
    %v1730 = vmul.f32 -0.5, %v1647
    %v1731 = vadd.f32 %v1730, 1.0
    %v1732 = vmul.f32 %v1731, %v1647
    %v1733 = vand.u32 2147483647, %v1647
    %vm1734 = vcmp.lt.f32.partialorder %v1733, 0.0004427343
    %v1735 = vsel %vm1734, %v1732, %v1729
    %v1736 = vadd.f32 %v1649, 1.0
    %v1737 = vlog2.pop %v1736
    %v1738 = vmul.f32 %v1737, 0.6931472
    %v1739 = vmul.f32 -0.5, %v1649
    %v1740 = vadd.f32 %v1739, 1.0
    %v1741 = vmul.f32 %v1740, %v1649
    %v1742 = vand.u32 2147483647, %v1649
    %vm1743 = vcmp.lt.f32.partialorder %v1742, 0.0004427343
    %v1744 = vsel %vm1743, %v1741, %v1738
    %v1745 = vadd.f32 %v1651, 1.0
    %v1746 = vlog2.pop %v1745
    %v1747 = vmul.f32 %v1746, 0.6931472
    %v1748 = vmul.f32 -0.5, %v1651
    %v1749 = vadd.f32 %v1748, 1.0
    %v1750 = vmul.f32 %v1749, %v1651
    %v1751 = vand.u32 2147483647, %v1651
    %vm1752 = vcmp.lt.f32.partialorder %v1751, 0.0004427343
    %v1753 = vsel %vm1752, %v1750, %v1747
    %v1754 = vadd.f32 %v1653, 1.0
    %v1755 = vlog2.pop %v1754
    %v1756 = vmul.f32 %v1755, 0.6931472
    %v1757 = vmul.f32 -0.5, %v1653
    %v1758 = vadd.f32 %v1757, 1.0
    %v1759 = vmul.f32 %v1758, %v1653
    %v1760 = vand.u32 2147483647, %v1653
    %vm1761 = vcmp.lt.f32.partialorder %v1760, 0.0004427343
    %v1762 = vsel %vm1761, %v1759, %v1756
    %v1763 = vadd.f32 %v1655, 1.0
    %v1764 = vlog2.pop %v1763
    %v1765 = vmul.f32 %v1764, 0.6931472
    %v1766 = vmul.f32 -0.5, %v1655
    %v1767 = vadd.f32 %v1766, 1.0
    %v1768 = vmul.f32 %v1767, %v1655
    %v1769 = vand.u32 2147483647, %v1655
    %vm1770 = vcmp.lt.f32.partialorder %v1769, 0.0004427343
    %v1771 = vsel %vm1770, %v1768, %v1765
    %v1772 = vadd.f32 %v1657, 1.0
    %v1773 = vlog2.pop %v1772
    %v1774 = vmul.f32 %v1773, 0.6931472
    %v1775 = vmul.f32 -0.5, %v1657
    %v1776 = vadd.f32 %v1775, 1.0
    %v1777 = vmul.f32 %v1776, %v1657
    %v1778 = vand.u32 2147483647, %v1657
    %vm1779 = vcmp.lt.f32.partialorder %v1778, 0.0004427343
    %v1780 = vsel %vm1779, %v1777, %v1774
    %v1781 = vadd.f32 %v1659, 1.0
    %v1782 = vlog2.pop %v1781
    %v1783 = vmul.f32 %v1782, 0.6931472
    %v1784 = vmul.f32 -0.5, %v1659
    %v1785 = vadd.f32 %v1784, 1.0
    %v1786 = vmul.f32 %v1785, %v1659
    %v1787 = vand.u32 2147483647, %v1659
    %vm1788 = vcmp.lt.f32.partialorder %v1787, 0.0004427343
    %v1789 = vsel %vm1788, %v1786, %v1783
    %v1790 = vadd.f32 %v1661, 1.0
    %v1791 = vlog2.pop %v1790
    %v1792 = vmul.f32 %v1791, 0.6931472
    %v1793 = vmul.f32 -0.5, %v1661
    %v1794 = vadd.f32 %v1793, 1.0
    %v1795 = vmul.f32 %v1794, %v1661
    %v1796 = vand.u32 2147483647, %v1661
    %vm1797 = vcmp.lt.f32.partialorder %v1796, 0.0004427343
    %v1798 = vsel %vm1797, %v1795, %v1792
    %v1799 = vadd.f32 %v1663, 1.0
    %v1800 = vlog2.pop %v1799
    %v1801 = vmul.f32 %v1800, 0.6931472
    %v1802 = vmul.f32 -0.5, %v1663
    %v1803 = vadd.f32 %v1802, 1.0
    %v1804 = vmul.f32 %v1803, %v1663
    %v1805 = vand.u32 2147483647, %v1663
    %vm1806 = vcmp.lt.f32.partialorder %v1805, 0.0004427343
    %v1807 = vsel %vm1806, %v1804, %v1801
    %v1808 = vsub.f32 %v1584, %v1672
    %v1809 = vsub.f32 %v1585, %v1681
    %v1810 = vsub.f32 %v1586, %v1690
    %v1811 = vsub.f32 %v1587, %v1699
    %v1812 = vsub.f32 %v1588, %v1708
    %v1813 = vsub.f32 %v1589, %v1717
    %v1814 = vsub.f32 %v1590, %v1726
    %v1815 = vsub.f32 %v1591, %v1735
    %v1816 = vsub.f32 %v1592, %v1744
    %v1817 = vsub.f32 %v1593, %v1753
    %v1818 = vsub.f32 %v1594, %v1762
    %v1819 = vsub.f32 %v1595, %v1771
    %v1820 = vsub.f32 %v1596, %v1780
    %v1821 = vsub.f32 %v1597, %v1789
    %v1822 = vsub.f32 %v1598, %v1798
    %v1823 = vsub.f32 %v1599, %v1807
    %v1824 = vadd.f32 %v1424, %v1808
    %v1825 = vadd.f32 %v1425, %v1809
    %v1826 = vadd.f32 %v1426, %v1810
    %v1827 = vadd.f32 %v1427, %v1811
    %v1828 = vadd.f32 %v1428, %v1812
    %v1829 = vadd.f32 %v1429, %v1813
    %v1830 = vadd.f32 %v1430, %v1814
    %v1831 = vadd.f32 %v1431, %v1815
    %v1832 = vadd.f32 %v1432, %v1816
    %v1833 = vadd.f32 %v1433, %v1817
    %v1834 = vadd.f32 %v1434, %v1818
    %v1835 = vadd.f32 %v1435, %v1819
    %v1836 = vadd.f32 %v1436, %v1820
    %v1837 = vadd.f32 %v1437, %v1821
    %v1838 = vadd.f32 %v1438, %v1822
    %v1839 = vadd.f32 %v1439, %v1823
    %1840 = vset.pattern.permute.xlu0 3
    %1841 = vperm.xlu0 %1840, %v624
    %v1842 = vpop.permute.xlu0 %1841
    %1843 = vset.pattern.permute.xlu0 3
    %1844 = vperm.xlu0 %1843, %v625
    %v1845 = vpop.permute.xlu0 %1844
    %1846 = vset.pattern.permute.xlu0 3
    %1847 = vperm.xlu0 %1846, %v626
    %v1848 = vpop.permute.xlu0 %1847
    %1849 = vset.pattern.permute.xlu0 3
    %1850 = vperm.xlu0 %1849, %v627
    %v1851 = vpop.permute.xlu0 %1850
    %1852 = vset.pattern.permute.xlu0 3
    %1853 = vperm.xlu0 %1852, %v628
    %v1854 = vpop.permute.xlu0 %1853
    %1855 = vset.pattern.permute.xlu0 3
    %1856 = vperm.xlu0 %1855, %v629
    %v1857 = vpop.permute.xlu0 %1856
    %1858 = vset.pattern.permute.xlu0 3
    %1859 = vperm.xlu0 %1858, %v630
    %v1860 = vpop.permute.xlu0 %1859
    %1861 = vset.pattern.permute.xlu0 3
    %1862 = vperm.xlu0 %1861, %v631
    %v1863 = vpop.permute.xlu0 %1862
    %1864 = vset.pattern.permute.xlu0 3
    %1865 = vperm.xlu0 %1864, %v632
    %v1866 = vpop.permute.xlu0 %1865
    %1867 = vset.pattern.permute.xlu0 3
    %1868 = vperm.xlu0 %1867, %v633
    %v1869 = vpop.permute.xlu0 %1868
    %1870 = vset.pattern.permute.xlu0 3
    %1871 = vperm.xlu0 %1870, %v634
    %v1872 = vpop.permute.xlu0 %1871
    %1873 = vset.pattern.permute.xlu0 3
    %1874 = vperm.xlu0 %1873, %v635
    %v1875 = vpop.permute.xlu0 %1874
    %1876 = vset.pattern.permute.xlu0 3
    %1877 = vperm.xlu0 %1876, %v636
    %v1878 = vpop.permute.xlu0 %1877
    %1879 = vset.pattern.permute.xlu0 3
    %1880 = vperm.xlu0 %1879, %v637
    %v1881 = vpop.permute.xlu0 %1880
    %1882 = vset.pattern.permute.xlu0 3
    %1883 = vperm.xlu0 %1882, %v638
    %v1884 = vpop.permute.xlu0 %1883
    %1885 = vset.pattern.permute.xlu0 3
    %1886 = vperm.xlu0 %1885, %v639
    %v1887 = vpop.permute.xlu0 %1886
    %vm1888 = vcmp.eq.s32.totalorder %v239, %v1842
    %vm1889 = vcmp.eq.s32.totalorder %v239, %v1845
    %vm1890 = vcmp.eq.s32.totalorder %v239, %v1848
    %vm1891 = vcmp.eq.s32.totalorder %v239, %v1851
    %vm1892 = vcmp.eq.s32.totalorder %v239, %v1854
    %vm1893 = vcmp.eq.s32.totalorder %v239, %v1857
    %vm1894 = vcmp.eq.s32.totalorder %v239, %v1860
    %vm1895 = vcmp.eq.s32.totalorder %v239, %v1863
    %vm1896 = vcmp.eq.s32.totalorder %v239, %v1866
    %vm1897 = vcmp.eq.s32.totalorder %v239, %v1869
    %vm1898 = vcmp.eq.s32.totalorder %v239, %v1872
    %vm1899 = vcmp.eq.s32.totalorder %v239, %v1875
    %vm1900 = vcmp.eq.s32.totalorder %v239, %v1878
    %vm1901 = vcmp.eq.s32.totalorder %v239, %v1881
    %vm1902 = vcmp.eq.s32.totalorder %v239, %v1884
    %vm1903 = vcmp.eq.s32.totalorder %v239, %v1887
    %v1904 = vsel %vm1888, %v160, 0.0
    %v1905 = vsel %vm1889, %v165, 0.0
    %v1906 = vsel %vm1890, %v170, 0.0
    %v1907 = vsel %vm1891, %v175, 0.0
    %v1908 = vsel %vm1892, %v180, 0.0
    %v1909 = vsel %vm1893, %v185, 0.0
    %v1910 = vsel %vm1894, %v190, 0.0
    %v1911 = vsel %vm1895, %v195, 0.0
    %v1912 = vsel %vm1896, %v200, 0.0
    %v1913 = vsel %vm1897, %v205, 0.0
    %v1914 = vsel %vm1898, %v210, 0.0
    %v1915 = vsel %vm1899, %v215, 0.0
    %v1916 = vsel %vm1900, %v220, 0.0
    %v1917 = vsel %vm1901, %v225, 0.0
    %v1918 = vsel %vm1902, %v230, 0.0
    %v1919 = vsel %vm1903, %v235, 0.0
    %v1920 = vsel %vm44, %v1904, 0.0
    %1921 = vadd.xlane.f32.xlu0 %v1920
    %v1922 = vpop.xlane.xlu0 %1921
    %v1923 = vsel %vm44, %v1905, 0.0
    %1924 = vadd.xlane.f32.xlu0 %v1923
    %v1925 = vpop.xlane.xlu0 %1924
    %v1926 = vsel %vm44, %v1906, 0.0
    %1927 = vadd.xlane.f32.xlu0 %v1926
    %v1928 = vpop.xlane.xlu0 %1927
    %v1929 = vsel %vm44, %v1907, 0.0
    %1930 = vadd.xlane.f32.xlu0 %v1929
    %v1931 = vpop.xlane.xlu0 %1930
    %v1932 = vsel %vm44, %v1908, 0.0
    %1933 = vadd.xlane.f32.xlu0 %v1932
    %v1934 = vpop.xlane.xlu0 %1933
    %v1935 = vsel %vm44, %v1909, 0.0
    %1936 = vadd.xlane.f32.xlu0 %v1935
    %v1937 = vpop.xlane.xlu0 %1936
    %v1938 = vsel %vm44, %v1910, 0.0
    %1939 = vadd.xlane.f32.xlu0 %v1938
    %v1940 = vpop.xlane.xlu0 %1939
    %v1941 = vsel %vm44, %v1911, 0.0
    %1942 = vadd.xlane.f32.xlu0 %v1941
    %v1943 = vpop.xlane.xlu0 %1942
    %v1944 = vsel %vm44, %v1912, 0.0
    %1945 = vadd.xlane.f32.xlu0 %v1944
    %v1946 = vpop.xlane.xlu0 %1945
    %v1947 = vsel %vm44, %v1913, 0.0
    %1948 = vadd.xlane.f32.xlu0 %v1947
    %v1949 = vpop.xlane.xlu0 %1948
    %v1950 = vsel %vm44, %v1914, 0.0
    %1951 = vadd.xlane.f32.xlu0 %v1950
    %v1952 = vpop.xlane.xlu0 %1951
    %v1953 = vsel %vm44, %v1915, 0.0
    %1954 = vadd.xlane.f32.xlu0 %v1953
    %v1955 = vpop.xlane.xlu0 %1954
    %v1956 = vsel %vm44, %v1916, 0.0
    %1957 = vadd.xlane.f32.xlu0 %v1956
    %v1958 = vpop.xlane.xlu0 %1957
    %v1959 = vsel %vm44, %v1917, 0.0
    %1960 = vadd.xlane.f32.xlu0 %v1959
    %v1961 = vpop.xlane.xlu0 %1960
    %v1962 = vsel %vm44, %v1918, 0.0
    %1963 = vadd.xlane.f32.xlu0 %v1962
    %v1964 = vpop.xlane.xlu0 %1963
    %v1965 = vsel %vm44, %v1919, 0.0
    %1966 = vadd.xlane.f32.xlu0 %v1965
    %v1967 = vpop.xlane.xlu0 %1966
    %v1968 = vsub.f32 0.0, %v1922
    %v1969 = vsub.f32 0.0, %v1925
    %v1970 = vsub.f32 0.0, %v1928
    %v1971 = vsub.f32 0.0, %v1931
    %v1972 = vsub.f32 0.0, %v1934
    %v1973 = vsub.f32 0.0, %v1937
    %v1974 = vsub.f32 0.0, %v1940
    %v1975 = vsub.f32 0.0, %v1943
    %v1976 = vsub.f32 0.0, %v1946
    %v1977 = vsub.f32 0.0, %v1949
    %v1978 = vsub.f32 0.0, %v1952
    %v1979 = vsub.f32 0.0, %v1955
    %v1980 = vsub.f32 0.0, %v1958
    %v1981 = vsub.f32 0.0, %v1961
    %v1982 = vsub.f32 0.0, %v1964
    %v1983 = vsub.f32 0.0, %v1967
    %v1984 = vmin.f32 %v1968, 0.0
    %v1985 = vmin.f32 %v1969, 0.0
    %v1986 = vmin.f32 %v1970, 0.0
    %v1987 = vmin.f32 %v1971, 0.0
    %v1988 = vmin.f32 %v1972, 0.0
    %v1989 = vmin.f32 %v1973, 0.0
    %v1990 = vmin.f32 %v1974, 0.0
    %v1991 = vmin.f32 %v1975, 0.0
    %v1992 = vmin.f32 %v1976, 0.0
    %v1993 = vmin.f32 %v1977, 0.0
    %v1994 = vmin.f32 %v1978, 0.0
    %v1995 = vmin.f32 %v1979, 0.0
    %v1996 = vmin.f32 %v1980, 0.0
    %v1997 = vmin.f32 %v1981, 0.0
    %v1998 = vmin.f32 %v1982, 0.0
    %v1999 = vmin.f32 %v1983, 0.0
    %v2000 = vand.u32 2147483647, %v1968
    %v2001 = vand.u32 2147483647, %v1969
    %v2002 = vand.u32 2147483647, %v1970
    %v2003 = vand.u32 2147483647, %v1971
    %v2004 = vand.u32 2147483647, %v1972
    %v2005 = vand.u32 2147483647, %v1973
    %v2006 = vand.u32 2147483647, %v1974
    %v2007 = vand.u32 2147483647, %v1975
    %v2008 = vand.u32 2147483647, %v1976
    %v2009 = vand.u32 2147483647, %v1977
    %v2010 = vand.u32 2147483647, %v1978
    %v2011 = vand.u32 2147483647, %v1979
    %v2012 = vand.u32 2147483647, %v1980
    %v2013 = vand.u32 2147483647, %v1981
    %v2014 = vand.u32 2147483647, %v1982
    %v2015 = vand.u32 2147483647, %v1983
    %v2016 = vsub.f32 0.0, %v2000
    %v2017 = vsub.f32 0.0, %v2001
    %v2018 = vsub.f32 0.0, %v2002
    %v2019 = vsub.f32 0.0, %v2003
    %v2020 = vsub.f32 0.0, %v2004
    %v2021 = vsub.f32 0.0, %v2005
    %v2022 = vsub.f32 0.0, %v2006
    %v2023 = vsub.f32 0.0, %v2007
    %v2024 = vsub.f32 0.0, %v2008
    %v2025 = vsub.f32 0.0, %v2009
    %v2026 = vsub.f32 0.0, %v2010
    %v2027 = vsub.f32 0.0, %v2011
    %v2028 = vsub.f32 0.0, %v2012
    %v2029 = vsub.f32 0.0, %v2013
    %v2030 = vsub.f32 0.0, %v2014
    %v2031 = vsub.f32 0.0, %v2015
    %v2032 = vmul.f32 %v2016, 1.442695
    %v2033 = vpow.pop %v2032
    %v2034 = vmul.f32 %v2017, 1.442695
    %v2035 = vpow.pop %v2034
    %v2036 = vmul.f32 %v2018, 1.442695
    %v2037 = vpow.pop %v2036
    %v2038 = vmul.f32 %v2019, 1.442695
    %v2039 = vpow.pop %v2038
    %v2040 = vmul.f32 %v2020, 1.442695
    %v2041 = vpow.pop %v2040
    %v2042 = vmul.f32 %v2021, 1.442695
    %v2043 = vpow.pop %v2042
    %v2044 = vmul.f32 %v2022, 1.442695
    %v2045 = vpow.pop %v2044
    %v2046 = vmul.f32 %v2023, 1.442695
    %v2047 = vpow.pop %v2046
    %v2048 = vmul.f32 %v2024, 1.442695
    %v2049 = vpow.pop %v2048
    %v2050 = vmul.f32 %v2025, 1.442695
    %v2051 = vpow.pop %v2050
    %v2052 = vmul.f32 %v2026, 1.442695
    %v2053 = vpow.pop %v2052
    %v2054 = vmul.f32 %v2027, 1.442695
    %v2055 = vpow.pop %v2054
    %v2056 = vmul.f32 %v2028, 1.442695
    %v2057 = vpow.pop %v2056
    %v2058 = vmul.f32 %v2029, 1.442695
    %v2059 = vpow.pop %v2058
    %v2060 = vmul.f32 %v2030, 1.442695
    %v2061 = vpow.pop %v2060
    %v2062 = vmul.f32 %v2031, 1.442695
    %v2063 = vpow.pop %v2062
    %v2064 = vadd.f32 %v2033, 1.0
    %v2065 = vlog2.pop %v2064
    %v2066 = vmul.f32 %v2065, 0.6931472
    %v2067 = vmul.f32 -0.5, %v2033
    %v2068 = vadd.f32 %v2067, 1.0
    %v2069 = vmul.f32 %v2068, %v2033
    %v2070 = vand.u32 2147483647, %v2033
    %vm2071 = vcmp.lt.f32.partialorder %v2070, 0.0004427343
    %v2072 = vsel %vm2071, %v2069, %v2066
    %v2073 = vadd.f32 %v2035, 1.0
    %v2074 = vlog2.pop %v2073
    %v2075 = vmul.f32 %v2074, 0.6931472
    %v2076 = vmul.f32 -0.5, %v2035
    %v2077 = vadd.f32 %v2076, 1.0
    %v2078 = vmul.f32 %v2077, %v2035
    %v2079 = vand.u32 2147483647, %v2035
    %vm2080 = vcmp.lt.f32.partialorder %v2079, 0.0004427343
    %v2081 = vsel %vm2080, %v2078, %v2075
    %v2082 = vadd.f32 %v2037, 1.0
    %v2083 = vlog2.pop %v2082
    %v2084 = vmul.f32 %v2083, 0.6931472
    %v2085 = vmul.f32 -0.5, %v2037
    %v2086 = vadd.f32 %v2085, 1.0
    %v2087 = vmul.f32 %v2086, %v2037
    %v2088 = vand.u32 2147483647, %v2037
    %vm2089 = vcmp.lt.f32.partialorder %v2088, 0.0004427343
    %v2090 = vsel %vm2089, %v2087, %v2084
    %v2091 = vadd.f32 %v2039, 1.0
    %v2092 = vlog2.pop %v2091
    %v2093 = vmul.f32 %v2092, 0.6931472
    %v2094 = vmul.f32 -0.5, %v2039
    %v2095 = vadd.f32 %v2094, 1.0
    %v2096 = vmul.f32 %v2095, %v2039
    %v2097 = vand.u32 2147483647, %v2039
    %vm2098 = vcmp.lt.f32.partialorder %v2097, 0.0004427343
    %v2099 = vsel %vm2098, %v2096, %v2093
    %v2100 = vadd.f32 %v2041, 1.0
    %v2101 = vlog2.pop %v2100
    %v2102 = vmul.f32 %v2101, 0.6931472
    %v2103 = vmul.f32 -0.5, %v2041
    %v2104 = vadd.f32 %v2103, 1.0
    %v2105 = vmul.f32 %v2104, %v2041
    %v2106 = vand.u32 2147483647, %v2041
    %vm2107 = vcmp.lt.f32.partialorder %v2106, 0.0004427343
    %v2108 = vsel %vm2107, %v2105, %v2102
    %v2109 = vadd.f32 %v2043, 1.0
    %v2110 = vlog2.pop %v2109
    %v2111 = vmul.f32 %v2110, 0.6931472
    %v2112 = vmul.f32 -0.5, %v2043
    %v2113 = vadd.f32 %v2112, 1.0
    %v2114 = vmul.f32 %v2113, %v2043
    %v2115 = vand.u32 2147483647, %v2043
    %vm2116 = vcmp.lt.f32.partialorder %v2115, 0.0004427343
    %v2117 = vsel %vm2116, %v2114, %v2111
    %v2118 = vadd.f32 %v2045, 1.0
    %v2119 = vlog2.pop %v2118
    %v2120 = vmul.f32 %v2119, 0.6931472
    %v2121 = vmul.f32 -0.5, %v2045
    %v2122 = vadd.f32 %v2121, 1.0
    %v2123 = vmul.f32 %v2122, %v2045
    %v2124 = vand.u32 2147483647, %v2045
    %vm2125 = vcmp.lt.f32.partialorder %v2124, 0.0004427343
    %v2126 = vsel %vm2125, %v2123, %v2120
    %v2127 = vadd.f32 %v2047, 1.0
    %v2128 = vlog2.pop %v2127
    %v2129 = vmul.f32 %v2128, 0.6931472
    %v2130 = vmul.f32 -0.5, %v2047
    %v2131 = vadd.f32 %v2130, 1.0
    %v2132 = vmul.f32 %v2131, %v2047
    %v2133 = vand.u32 2147483647, %v2047
    %vm2134 = vcmp.lt.f32.partialorder %v2133, 0.0004427343
    %v2135 = vsel %vm2134, %v2132, %v2129
    %v2136 = vadd.f32 %v2049, 1.0
    %v2137 = vlog2.pop %v2136
    %v2138 = vmul.f32 %v2137, 0.6931472
    %v2139 = vmul.f32 -0.5, %v2049
    %v2140 = vadd.f32 %v2139, 1.0
    %v2141 = vmul.f32 %v2140, %v2049
    %v2142 = vand.u32 2147483647, %v2049
    %vm2143 = vcmp.lt.f32.partialorder %v2142, 0.0004427343
    %v2144 = vsel %vm2143, %v2141, %v2138
    %v2145 = vadd.f32 %v2051, 1.0
    %v2146 = vlog2.pop %v2145
    %v2147 = vmul.f32 %v2146, 0.6931472
    %v2148 = vmul.f32 -0.5, %v2051
    %v2149 = vadd.f32 %v2148, 1.0
    %v2150 = vmul.f32 %v2149, %v2051
    %v2151 = vand.u32 2147483647, %v2051
    %vm2152 = vcmp.lt.f32.partialorder %v2151, 0.0004427343
    %v2153 = vsel %vm2152, %v2150, %v2147
    %v2154 = vadd.f32 %v2053, 1.0
    %v2155 = vlog2.pop %v2154
    %v2156 = vmul.f32 %v2155, 0.6931472
    %v2157 = vmul.f32 -0.5, %v2053
    %v2158 = vadd.f32 %v2157, 1.0
    %v2159 = vmul.f32 %v2158, %v2053
    %v2160 = vand.u32 2147483647, %v2053
    %vm2161 = vcmp.lt.f32.partialorder %v2160, 0.0004427343
    %v2162 = vsel %vm2161, %v2159, %v2156
    %v2163 = vadd.f32 %v2055, 1.0
    %v2164 = vlog2.pop %v2163
    %v2165 = vmul.f32 %v2164, 0.6931472
    %v2166 = vmul.f32 -0.5, %v2055
    %v2167 = vadd.f32 %v2166, 1.0
    %v2168 = vmul.f32 %v2167, %v2055
    %v2169 = vand.u32 2147483647, %v2055
    %vm2170 = vcmp.lt.f32.partialorder %v2169, 0.0004427343
    %v2171 = vsel %vm2170, %v2168, %v2165
    %v2172 = vadd.f32 %v2057, 1.0
    %v2173 = vlog2.pop %v2172
    %v2174 = vmul.f32 %v2173, 0.6931472
    %v2175 = vmul.f32 -0.5, %v2057
    %v2176 = vadd.f32 %v2175, 1.0
    %v2177 = vmul.f32 %v2176, %v2057
    %v2178 = vand.u32 2147483647, %v2057
    %vm2179 = vcmp.lt.f32.partialorder %v2178, 0.0004427343
    %v2180 = vsel %vm2179, %v2177, %v2174
    %v2181 = vadd.f32 %v2059, 1.0
    %v2182 = vlog2.pop %v2181
    %v2183 = vmul.f32 %v2182, 0.6931472
    %v2184 = vmul.f32 -0.5, %v2059
    %v2185 = vadd.f32 %v2184, 1.0
    %v2186 = vmul.f32 %v2185, %v2059
    %v2187 = vand.u32 2147483647, %v2059
    %vm2188 = vcmp.lt.f32.partialorder %v2187, 0.0004427343
    %v2189 = vsel %vm2188, %v2186, %v2183
    %v2190 = vadd.f32 %v2061, 1.0
    %v2191 = vlog2.pop %v2190
    %v2192 = vmul.f32 %v2191, 0.6931472
    %v2193 = vmul.f32 -0.5, %v2061
    %v2194 = vadd.f32 %v2193, 1.0
    %v2195 = vmul.f32 %v2194, %v2061
    %v2196 = vand.u32 2147483647, %v2061
    %vm2197 = vcmp.lt.f32.partialorder %v2196, 0.0004427343
    %v2198 = vsel %vm2197, %v2195, %v2192
    %v2199 = vadd.f32 %v2063, 1.0
    %v2200 = vlog2.pop %v2199
    %v2201 = vmul.f32 %v2200, 0.6931472
    %v2202 = vmul.f32 -0.5, %v2063
    %v2203 = vadd.f32 %v2202, 1.0
    %v2204 = vmul.f32 %v2203, %v2063
    %v2205 = vand.u32 2147483647, %v2063
    %vm2206 = vcmp.lt.f32.partialorder %v2205, 0.0004427343
    %v2207 = vsel %vm2206, %v2204, %v2201
    %v2208 = vsub.f32 %v1984, %v2072
    %v2209 = vsub.f32 %v1985, %v2081
    %v2210 = vsub.f32 %v1986, %v2090
    %v2211 = vsub.f32 %v1987, %v2099
    %v2212 = vsub.f32 %v1988, %v2108
    %v2213 = vsub.f32 %v1989, %v2117
    %v2214 = vsub.f32 %v1990, %v2126
    %v2215 = vsub.f32 %v1991, %v2135
    %v2216 = vsub.f32 %v1992, %v2144
    %v2217 = vsub.f32 %v1993, %v2153
    %v2218 = vsub.f32 %v1994, %v2162
    %v2219 = vsub.f32 %v1995, %v2171
    %v2220 = vsub.f32 %v1996, %v2180
    %v2221 = vsub.f32 %v1997, %v2189
    %v2222 = vsub.f32 %v1998, %v2198
    %v2223 = vsub.f32 %v1999, %v2207
    %v2224 = vadd.f32 %v1824, %v2208
    %v2225 = vadd.f32 %v1825, %v2209
    %v2226 = vadd.f32 %v1826, %v2210
    %v2227 = vadd.f32 %v1827, %v2211
    %v2228 = vadd.f32 %v1828, %v2212
    %v2229 = vadd.f32 %v1829, %v2213
    %v2230 = vadd.f32 %v1830, %v2214
    %v2231 = vadd.f32 %v1831, %v2215
    %v2232 = vadd.f32 %v1832, %v2216
    %v2233 = vadd.f32 %v1833, %v2217
    %v2234 = vadd.f32 %v1834, %v2218
    %v2235 = vadd.f32 %v1835, %v2219
    %v2236 = vadd.f32 %v1836, %v2220
    %v2237 = vadd.f32 %v1837, %v2221
    %v2238 = vadd.f32 %v1838, %v2222
    %v2239 = vadd.f32 %v1839, %v2223
    %s2240 = smul.u32 0, 128
    %v2241 = vlaneseq
    %v2242 = vshrl.u32 %v2241, 7
    %v2243 = vadd.s32 %v2242, 8
    %v2244 = vadd.s32 %v2242, 16
    %v2245 = vadd.s32 %v2242, 24
    %v2246 = vadd.s32 %v2242, 32
    %v2247 = vadd.s32 %v2242, 40
    %v2248 = vadd.s32 %v2242, 48
    %v2249 = vadd.s32 %v2242, 56
    %v2250 = vadd.s32 %v2242, 64
    %v2251 = vadd.s32 %v2242, 72
    %v2252 = vadd.s32 %v2242, 80
    %v2253 = vadd.s32 %v2242, 88
    %v2254 = vadd.s32 %v2242, 96
    %v2255 = vadd.s32 %v2242, 104
    %v2256 = vadd.s32 %v2242, 112
    %v2257 = vadd.s32 %v2242, 120
    %v2258 = vstv %s2240
    %v2259 = vadd.s32 %v2258, %v2242
    %v2260 = vadd.s32 %v2258, %v2243
    %v2261 = vadd.s32 %v2258, %v2244
    %v2262 = vadd.s32 %v2258, %v2245
    %v2263 = vadd.s32 %v2258, %v2246
    %v2264 = vadd.s32 %v2258, %v2247
    %v2265 = vadd.s32 %v2258, %v2248
    %v2266 = vadd.s32 %v2258, %v2249
    %v2267 = vadd.s32 %v2258, %v2250
    %v2268 = vadd.s32 %v2258, %v2251
    %v2269 = vadd.s32 %v2258, %v2252
    %v2270 = vadd.s32 %v2258, %v2253
    %v2271 = vadd.s32 %v2258, %v2254
    %v2272 = vadd.s32 %v2258, %v2255
    %v2273 = vadd.s32 %v2258, %v2256
    %v2274 = vadd.s32 %v2258, %v2257
    %vm2275 = vcmp.lt.s32.totalorder %v2259, 16
    %vm2276 = vcmp.lt.s32.totalorder %v2260, 16
    %vm2277 = vcmp.lt.s32.totalorder %v2261, 16
    %vm2278 = vcmp.lt.s32.totalorder %v2262, 16
    %vm2279 = vcmp.lt.s32.totalorder %v2263, 16
    %vm2280 = vcmp.lt.s32.totalorder %v2264, 16
    %vm2281 = vcmp.lt.s32.totalorder %v2265, 16
    %vm2282 = vcmp.lt.s32.totalorder %v2266, 16
    %vm2283 = vcmp.lt.s32.totalorder %v2267, 16
    %vm2284 = vcmp.lt.s32.totalorder %v2268, 16
    %vm2285 = vcmp.lt.s32.totalorder %v2269, 16
    %vm2286 = vcmp.lt.s32.totalorder %v2270, 16
    %vm2287 = vcmp.lt.s32.totalorder %v2271, 16
    %vm2288 = vcmp.lt.s32.totalorder %v2272, 16
    %vm2289 = vcmp.lt.s32.totalorder %v2273, 16
    %vm2290 = vcmp.lt.s32.totalorder %v2274, 16
    %v2291 = vsel %vm2275, 1, 0
    %v2292 = vsel %vm2276, 1, 0
    %v2293 = vsel %vm2277, 1, 0
    %v2294 = vsel %vm2278, 1, 0
    %v2295 = vsel %vm2279, 1, 0
    %v2296 = vsel %vm2280, 1, 0
    %v2297 = vsel %vm2281, 1, 0
    %v2298 = vsel %vm2282, 1, 0
    %v2299 = vsel %vm2283, 1, 0
    %v2300 = vsel %vm2284, 1, 0
    %v2301 = vsel %vm2285, 1, 0
    %v2302 = vsel %vm2286, 1, 0
    %v2303 = vsel %vm2287, 1, 0
    %v2304 = vsel %vm2288, 1, 0
    %v2305 = vsel %vm2289, 1, 0
    %v2306 = vsel %vm2290, 1, 0
    %v2307 = vcvt.s32.f32 %v2291
    %v2308 = vcvt.s32.f32 %v2292
    %v2309 = vcvt.s32.f32 %v2293
    %v2310 = vcvt.s32.f32 %v2294
    %v2311 = vcvt.s32.f32 %v2295
    %v2312 = vcvt.s32.f32 %v2296
    %v2313 = vcvt.s32.f32 %v2297
    %v2314 = vcvt.s32.f32 %v2298
    %v2315 = vcvt.s32.f32 %v2299
    %v2316 = vcvt.s32.f32 %v2300
    %v2317 = vcvt.s32.f32 %v2301
    %v2318 = vcvt.s32.f32 %v2302
    %v2319 = vcvt.s32.f32 %v2303
    %v2320 = vcvt.s32.f32 %v2304
    %v2321 = vcvt.s32.f32 %v2305
    %v2322 = vcvt.s32.f32 %v2306
    %v2323 = vmul.f32 %v2224, %v2307
    %v2324 = vmul.f32 %v2225, %v2308
    %v2325 = vmul.f32 %v2226, %v2309
    %v2326 = vmul.f32 %v2227, %v2310
    %v2327 = vmul.f32 %v2228, %v2311
    %v2328 = vmul.f32 %v2229, %v2312
    %v2329 = vmul.f32 %v2230, %v2313
    %v2330 = vmul.f32 %v2231, %v2314
    %v2331 = vmul.f32 %v2232, %v2315
    %v2332 = vmul.f32 %v2233, %v2316
    %v2333 = vmul.f32 %v2234, %v2317
    %v2334 = vmul.f32 %v2235, %v2318
    %v2335 = vmul.f32 %v2236, %v2319
    %v2336 = vmul.f32 %v2237, %v2320
    %v2337 = vmul.f32 %v2238, %v2321
    %v2338 = vmul.f32 %v2239, %v2322
    %vm2339 = vcmask 7168
    %v2340 = vsel %vm2339, %v2323, 0.0
    %v2341 = vsel %vm2339, %v2324, 0.0
    %v2342 = vadd.f32 %v2340, %v2341
    %v2343 = vsel %vm2339, %v2325, 0.0
    %v2344 = vadd.f32 %v2342, %v2343
    %v2345 = vsel %vm2339, %v2326, 0.0
    %v2346 = vadd.f32 %v2344, %v2345
    %v2347 = vsel %vm2339, %v2327, 0.0
    %v2348 = vadd.f32 %v2346, %v2347
    %v2349 = vsel %vm2339, %v2328, 0.0
    %v2350 = vadd.f32 %v2348, %v2349
    %v2351 = vsel %vm2339, %v2329, 0.0
    %v2352 = vadd.f32 %v2350, %v2351
    %v2353 = vsel %vm2339, %v2330, 0.0
    %v2354 = vadd.f32 %v2352, %v2353
    %v2355 = vsel %vm2339, %v2331, 0.0
    %v2356 = vadd.f32 %v2354, %v2355
    %v2357 = vsel %vm2339, %v2332, 0.0
    %v2358 = vadd.f32 %v2356, %v2357
    %v2359 = vsel %vm2339, %v2333, 0.0
    %v2360 = vadd.f32 %v2358, %v2359
    %v2361 = vsel %vm2339, %v2334, 0.0
    %v2362 = vadd.f32 %v2360, %v2361
    %v2363 = vsel %vm2339, %v2335, 0.0
    %v2364 = vadd.f32 %v2362, %v2363
    %v2365 = vsel %vm2339, %v2336, 0.0
    %v2366 = vadd.f32 %v2364, %v2365
    %v2367 = vsel %vm2339, %v2337, 0.0
    %v2368 = vadd.f32 %v2366, %v2367
    %v2369 = vsel %vm2339, %v2338, 0.0
    %v2370 = vadd.f32 %v2368, %v2369
    %2371 = vadd.xlane.f32.xlu0 %v2370
    %v2372 = vpop.xlane.xlu0 %2371
    %v2373 = vrot.slane %v2372, 4
    %v2374 = vadd.f32 %v2372, %v2373
    %v2375 = vrot.slane %v2374, 2
    %v2376 = vadd.f32 %v2374, %v2375
    %v2377 = vrot.slane %v2376, 1
    %v2378 = vadd.f32 %v2376, %v2377
    %s2379 = vtos %v2378
    %s2380 = ssub.f32 0.0, %s2379
    %v2381 = vld [vmem:[#allocation2] sm:$0x1]
    %v2382 = vstv %s2380
    %v2383 = vadd.f32 %v2381, %v2382
    %vm2384 = vcmask 0
    %2385 = vst.msk [vmem:[#allocation2] sm:$0x1] %vm2384, %v2383
    // Predicated region
    $region22: #{tpu_custom_call.1} parent=1 // pred_check
      _
    $region23: #{tpu_custom_call.1} parent=1 // pred_check_branch
      %2387 = sbr.rel (0) target = $region25
    $region24: #{tpu_custom_call.1} parent=1 // pred_region
      %s2389 = ssub.s32 16, 16
      %2390 = vsyncadd [#allocation3], %s2389
      %s2392 = sshll.u32 [#allocation2], 4
      %s2393 = int_to_ptr.vmem [resolvable:$true] %s2392
      %2395 = dma.vmem_to_hbm [thread:$0]  %s2393, 16, %s4, [#allocation3]
    $region25: #{tpu_custom_call.1} parent=1 // pred_fallthru
      _
    // Predicated region
    $region26: #{tpu_custom_call.1} parent=1 // pred_check
      _
    $region27: #{tpu_custom_call.1} parent=1 // pred_check_branch
      %2397 = sbr.rel (0) target = $region29
    $region28: #{tpu_custom_call.1} parent=1 // pred_region
      %2398 = dma.done [#allocation3], 16
    $region29: #{tpu_custom_call.1} parent=1 // pred_fallthru
      _
    %2399 = vsyncpa [#allocation3], 1

</llo_original>
